<compile_context>
chip_gen: v7x
topology: tpu7x:2x2x1
jax: 0.10.0
libtpu: 0.0.40
codegen_flags: <defaults>
</compile_context>

<pallas_src>
import jax
import jax.numpy as jnp
import numpy as np
from jax.experimental import pallas as pl
from jax.experimental.pallas import tpu as pltpu


# ------------------------------ helpers --------------------------------------

def _ceil_to(x, m):
    return ((x + m - 1) // m) * m


def _sigmoid(x):
    # stable sigmoid: exp of a non-positive number + one approx reciprocal (EUP)
    e = jnp.exp(-jnp.abs(x))
    r = pl.reciprocal(1.0 + e, approx=True)
    return jnp.where(x >= 0, r, e * r)


def _vmem_spec():
    return pl.BlockSpec(memory_space=pltpu.MemorySpace.VMEM)


# ------------------------------ Pallas kernel ---------------------------------

def decoder_kernel(z_ref, wh_ref, bh_ref,
                   w2e_ref, w2o_ref, w2n_ref, b2_ref,
                   w3e_ref, w3o_ref, w3n_ref, b3_ref,
                   o_ref, xbuf, ebuf):
    # Row convention for all row buffers / outputs: row index = a * Bp + b,
    # where a is the spatial row of the current stage and b the (padded) batch.
    f32 = jnp.float32
    bf16 = jnp.bfloat16
    Bp = z_ref.shape[0]          # padded batch, multiple of 8
    n = 7 * Bp                   # number of "real" rows
    K1 = xbuf.shape[1]           # padded per-row width of stage-1 output
    PH = ebuf.shape[1]           # padded per-phase width of stage-2 output

    # ---- stage 1: fc folded with the 1x1->7x7 head deconv, ReLU (one matmul) -
    h = jnp.dot(z_ref[...].astype(bf16), wh_ref[...],
                preferred_element_type=f32) + bh_ref[...]
    h = jnp.maximum(h, 0.0)                       # (Bp, 7*K1)

    xbuf[n:n + Bp, :] = jnp.zeros((Bp, K1), f32)  # out-of-range "next row" = 0
    for a in range(7):                            # 7 aligned (Bp, K1) stores
        xbuf[a * Bp:(a + 1) * Bp, :] = h[:, a * K1:(a + 1) * K1]
    x_cur = xbuf[0:n, :].astype(bf16)             # input row a
    x_nxt = xbuf[Bp:n + Bp, :].astype(bf16)       # input row a+1 (0 past edge)

    # ---- stage 2: stride-2 deconv #2 + ReLU, split by output-row phase -------
    # even output row 2a   <- row a   (kh=1)
    # odd  output row 2a+1 <- row a   (kh=2)  +  row a+1 (kh=0)
    even = jnp.maximum(
        jnp.dot(x_cur, w2e_ref[...], preferred_element_type=f32) + b2_ref[...],
        0.0)
    odd = jnp.maximum(
        jnp.dot(x_cur, w2o_ref[...], preferred_element_type=f32)
        + jnp.dot(x_nxt, w2n_ref[...], preferred_element_type=f32)
        + b2_ref[...],
        0.0)

    # Only the even phase of the NEXT row group is re-read (for image row 4a+3),
    # so only `even` goes through a VMEM buffer.
    ebuf[n:n + Bp, :] = jnp.zeros((Bp, PH), f32)
    ebuf[0:n, :] = even
    e_nxt = ebuf[Bp:n + Bp, :].astype(bf16)       # r_{2a+2} (0 past edge)

    # ---- stage 3: stride-2 deconv #3 + Sigmoid --------------------------------
    # image rows 4a..4a+3 from (r_2a, r_2a+1, r_2a+2); output cols [0:112] real.
    o = (jnp.dot(even.astype(bf16), w3e_ref[...], preferred_element_type=f32)
         + jnp.dot(odd.astype(bf16), w3o_ref[...], preferred_element_type=f32)
         + jnp.dot(e_nxt, w3n_ref[...], preferred_element_type=f32)
         + b3_ref[...])
    o_ref[...] = _sigmoid(o)


def decoder_pallas(z, prep):
    wh, bh, w2e, w2o, w2n, b2p, w3e, w3o, w3n, b3p = prep
    B, L = z.shape
    Bp = max(8, ((B + 7) // 8) * 8)   # sublane-aligned batch
    K1 = wh.shape[1] // 7
    PH = w2e.shape[1]
    NOUT = w3e.shape[1]               # 128 (lane-dense; 112 real pixels)

    z_pad = jnp.zeros((Bp, L), z.dtype).at[:B].set(z)

    out = pl.pallas_call(
        decoder_kernel,
        out_shape=jax.ShapeDtypeStruct((7 * Bp, NOUT), jnp.float32),
        in_specs=[_vmem_spec()] * 11,
        out_specs=_vmem_spec(),
        scratch_shapes=[pltpu.VMEM((8 * Bp, K1), jnp.float32),
                        pltpu.VMEM((8 * Bp, PH), jnp.float32)],
    )(z_pad, wh, bh, w2e, w2o, w2n, b2p, w3e, w3o, w3n, b3p)

    # rows are (a, b); each row holds image rows 4a..4a+3, 28 px each.
    img = out[:, :112].reshape(7, Bp, 4, 28).transpose(1, 0, 2, 3)
    return img.reshape(Bp, 1, 28, 28)[:B]


# ----------------- one-time (outside-jit) weight preparation ------------------

def _conv_col_matrix(w, kh, win, wout):
    """ConvTranspose2d(k=3, s=2, p=1) column map for a fixed kernel row `kh`.

    w: (Cin, Cout, 3, 3) PyTorch-layout ConvT weight.
    Returns M: (win*Cin, wout*Cout) with
      M[iw*Cin+ci, ow*Cout+co] = w[ci, co, kh, kw],  ow = 2*iw - 1 + kw.
    """
    cin, cout = w.shape[0], w.shape[1]
    m = np.zeros((win * cin, wout * cout), np.float32)
    for iw in range(win):
        for kw in range(3):
            ow = 2 * iw - 1 + kw
            if 0 <= ow < wout:
                m[iw * cin:(iw + 1) * cin, ow * cout:(ow + 1) * cout] = w[:, :, kh, kw]
    return m


def prepare_params(params):
    wfc, bfc, w1, b1, w2, b2, w3, b3 = [np.asarray(p, np.float32) for p in params]
    L = wfc.shape[0]             # latent_dim (wfc stored as (in, out))
    C1 = w1.shape[1]             # = L
    C2 = w2.shape[1]             # = L // 2

    # ---- head: fold fc into the 7x7 deconv acting on a 1x1 input (exact) ----
    w1r = w1.transpose(0, 2, 3, 1).reshape(2 * L, 49 * C1)   # cols = (i, j, c)
    w_head = wfc @ w1r                                       # (L, 49*C1)
    b_head = bfc @ w1r + np.tile(b1, 49)                     # (49*C1,)

    row1 = 7 * C1                       # real per-row width of stage-1 output
    K1 = _ceil_to(row1, 128)            # lane-padded (224 -> 256)
    wh = np.zeros((L, 7 * K1), np.float32)
    bh = np.zeros((1, 7 * K1), np.float32)
    for a in range(7):
        wh[:, a * K1:a * K1 + row1] = w_head[:, a * row1:(a + 1) * row1]
        bh[0, a * K1:a * K1 + row1] = b_head[a * row1:(a + 1) * row1]

    # ---- deconv2 row matrices (zero-pruned, per output-row phase) ------------
    row2 = 14 * C2                      # real per-phase width of stage-2 output
    PH = _ceil_to(row2, 128)            # lane-padded (224 -> 256)
    k0 = _conv_col_matrix(w2, 0, 7, 14)
    k1 = _conv_col_matrix(w2, 1, 7, 14)
    k2 = _conv_col_matrix(w2, 2, 7, 14)
    w2e = np.zeros((K1, PH), np.float32); w2e[:row1, :row2] = k1   # row 2a   <- a
    w2o = np.zeros((K1, PH), np.float32); w2o[:row1, :row2] = k2   # row 2a+1 <- a
    w2n = np.zeros((K1, PH), np.float32); w2n[:row1, :row2] = k0   # row 2a+1 <- a+1
    b2p = np.zeros((1, PH), np.float32); b2p[0, :row2] = np.tile(b2, 14)

    # ---- deconv3 row matrices (zero-pruned, lane-dense output) ---------------
    NOUT = 128                          # 4*28 = 112 real columns, padded to 128
    a0 = _conv_col_matrix(w3, 0, 14, 28)
    a1 = _conv_col_matrix(w3, 1, 14, 28)
    a2 = _conv_col_matrix(w3, 2, 14, 28)
    w3e = np.zeros((PH, NOUT), np.float32)       # from r_2a (even phase)
    w3e[:row2, 0:28] = a1                        # image row 4a
    w3e[:row2, 28:56] = a2                       # image row 4a+1
    w3o = np.zeros((PH, NOUT), np.float32)       # from r_2a+1 (odd phase)
    w3o[:row2, 28:56] = a0                       # image row 4a+1
    w3o[:row2, 56:84] = a1                       # image row 4a+2
    w3o[:row2, 84:112] = a2                      # image row 4a+3
    w3n = np.zeros((PH, NOUT), np.float32)       # from r_2a+2 (next even phase)
    w3n[:row2, 84:112] = a0                      # image row 4a+3
    b3p = np.zeros((1, NOUT), np.float32); b3p[0, :112] = b3[0]

    bf = lambda a: jnp.asarray(a, jnp.bfloat16)
    f32 = lambda a: jnp.asarray(a, jnp.float32)
    return (bf(wh), f32(bh), bf(w2e), bf(w2o), bf(w2n), f32(b2p),
            bf(w3e), bf(w3o), bf(w3n), f32(b3p))


# --------------------------- pure-JAX reference --------------------------------

def convT_ref(x, wt, bias, stride, pad, opad):
    k = wt.shape[2]
    rhs = jnp.flip(wt, (2, 3)).transpose(1, 0, 2, 3)     # (Cout, Cin, k, k)
    lo = k - 1 - pad
    hi = k - 1 - pad + opad
    y = jax.lax.conv_general_dilated(
        x, rhs, window_strides=(1, 1),
        padding=[(lo, hi), (lo, hi)],
        lhs_dilation=(stride, stride),
        dimension_numbers=("NCHW", "OIHW", "NCHW"))
    return y + bias.reshape(1, -1, 1, 1)


def decoder_ref(z, params):
    wfc, bfc, w1, b1, w2, b2, w3, b3 = params
    b = z.shape[0]
    h = z @ wfc + bfc                        # wfc stored as (in, out)
    x = h.reshape(b, wfc.shape[1], 1, 1)
    x = jax.nn.relu(convT_ref(x, w1, b1, 1, 0, 0))
    x = jax.nn.relu(convT_ref(x, w2, b2, 2, 1, 1))
    x = jax.nn.sigmoid(convT_ref(x, w3, b3, 2, 1, 1))
    return x


# --------------------------------- main ----------------------------------------

def init_params(keys, latent_dim):
    L = latent_dim
    wfc = jax.random.normal(keys[0], (L, 2 * L), jnp.float32) * 0.10
    bfc = jax.random.normal(keys[1], (2 * L,), jnp.float32) * 0.10
    w1 = jax.random.normal(keys[2], (2 * L, L, 7, 7), jnp.float32) * 0.05
    b1 = jax.random.normal(keys[3], (L,), jnp.float32) * 0.05
    w2 = jax.random.normal(keys[4], (L, L // 2, 3, 3), jnp.float32) * 0.10
    b2 = jax.random.normal(keys[5], (L // 2,), jnp.float32) * 0.05
    w3 = jax.random.normal(keys[6], (L // 2, 1, 3, 3), jnp.float32) * 0.10
    b3 = jax.random.normal(keys[7], (1,), jnp.float32) * 0.05
    return (wfc, bfc, w1, b1, w2, b2, w3, b3)


if __name__ == "__main__":
    B, LATENT = 2, 32
    key = jax.random.PRNGKey(0)
    kz, *kparams = jax.random.split(key, 9)
    z = jax.random.normal(kz, (B, LATENT), jnp.float32)
    params = init_params(kparams, LATENT)

    prep = prepare_params(params)                 # one-time, outside jit
    fwd = jax.jit(decoder_pallas)

    out = jax.block_until_ready(fwd(z, prep))
    assert out.shape == (B, 1, 28, 28), out.shape

    ref = decoder_ref(z, params)
    np.testing.assert_allclose(np.asarray(out), np.asarray(ref),
                               atol=1e-2, rtol=1e-2)

    print("KERNEL_OK")
</pallas_src>

<mosaic_0001>
module attributes {stable_mosaic.version = 11 : i64} {
  func.func @decoder_kernel(%arg0: memref<8x32xf32, #tpu.memory_space<vmem>>, %arg1: memref<32x1792xbf16, #tpu.memory_space<vmem>>, %arg2: memref<1x1792xf32, #tpu.memory_space<vmem>>, %arg3: memref<256x256xbf16, #tpu.memory_space<vmem>>, %arg4: memref<256x256xbf16, #tpu.memory_space<vmem>>, %arg5: memref<256x256xbf16, #tpu.memory_space<vmem>>, %arg6: memref<1x256xf32, #tpu.memory_space<vmem>>, %arg7: memref<256x128xbf16, #tpu.memory_space<vmem>>, %arg8: memref<256x128xbf16, #tpu.memory_space<vmem>>, %arg9: memref<256x128xbf16, #tpu.memory_space<vmem>>, %arg10: memref<1x128xf32, #tpu.memory_space<vmem>>, %arg11: memref<56x128xf32, #tpu.memory_space<vmem>>, %arg12: memref<64x256xf32, #tpu.memory_space<vmem>>, %arg13: memref<64x256xf32, #tpu.memory_space<vmem>>) attributes {dimension_semantics = [], scalar_prefetch = 0 : i64, scratch_operands = 2 : i64, tpu.core_type = #tpu.core_type<tc>} {
    %c0 = arith.constant 0 : index
    %c0_0 = arith.constant 0 : index
    %0 = vector.load %arg0[%c0, %c0_0] : memref<8x32xf32, #tpu.memory_space<vmem>>, vector<8x32xf32>
    %1 = arith.truncf %0 : vector<8x32xf32> to vector<8x32xbf16>
    %c0_1 = arith.constant 0 : index
    %c0_2 = arith.constant 0 : index
    %2 = vector.load %arg1[%c0_1, %c0_2] : memref<32x1792xbf16, #tpu.memory_space<vmem>>, vector<32x1792xbf16>
    %cst = arith.constant dense<0.000000e+00> : vector<8x1792xf32>
    %3 = tpu.matmul %1, %2, %cst {dimension_numbers = #tpu.dot_dimension_numbers<[1], [0], [0], [1], [0, 0, 1, 1], [], []>} : vector<8x32xbf16>, vector<32x1792xbf16>, vector<8x1792xf32> -> vector<8x1792xf32>
    %c0_3 = arith.constant 0 : index
    %c0_4 = arith.constant 0 : index
    %4 = vector.load %arg2[%c0_3, %c0_4] : memref<1x1792xf32, #tpu.memory_space<vmem>>, vector<1x1792xf32>
    %5 = vector.broadcast %4 : vector<1x1792xf32> to vector<8x1792xf32>
    %6 = arith.addf %3, %5 : vector<8x1792xf32>
    %cst_5 = arith.constant 0.000000e+00 : f32
    %7 = vector.broadcast %cst_5 : f32 to vector<8x1792xf32>
    %8 = arith.maximumf %6, %7 : vector<8x1792xf32>
    %cst_6 = arith.constant 0.000000e+00 : f32
    %9 = vector.broadcast %cst_6 : f32 to vector<8x256xf32>
    %c56 = arith.constant 56 : index
    %c0_7 = arith.constant 0 : index
    %10 = vector.load %arg12[%c56, %c0_7] : memref<64x256xf32, #tpu.memory_space<vmem>>, vector<8x256xf32>
    tpu.vector_store %arg12[%c56, %c0_7], %9 {strides = array<i32>} : memref<64x256xf32, #tpu.memory_space<vmem>>, vector<8x256xf32>,
    %11 = vector.extract_strided_slice %8 {offsets = [0, 0], sizes = [8, 256], strides = [1, 1]} : vector<8x1792xf32> to vector<8x256xf32>
    %c0_8 = arith.constant 0 : index
    %c0_9 = arith.constant 0 : index
    %12 = vector.load %arg12[%c0_8, %c0_9] : memref<64x256xf32, #tpu.memory_space<vmem>>, vector<8x256xf32>
    tpu.vector_store %arg12[%c0_8, %c0_9], %11 {strides = array<i32>} : memref<64x256xf32, #tpu.memory_space<vmem>>, vector<8x256xf32>,
    %13 = vector.extract_strided_slice %8 {offsets = [0, 256], sizes = [8, 256], strides = [1, 1]} : vector<8x1792xf32> to vector<8x256xf32>
    %c8 = arith.constant 8 : index
    %c0_10 = arith.constant 0 : index
    %14 = vector.load %arg12[%c8, %c0_10] : memref<64x256xf32, #tpu.memory_space<vmem>>, vector<8x256xf32>
    tpu.vector_store %arg12[%c8, %c0_10], %13 {strides = array<i32>} : memref<64x256xf32, #tpu.memory_space<vmem>>, vector<8x256xf32>,
    %15 = vector.extract_strided_slice %8 {offsets = [0, 512], sizes = [8, 256], strides = [1, 1]} : vector<8x1792xf32> to vector<8x256xf32>
    %c16 = arith.constant 16 : index
    %c0_11 = arith.constant 0 : index
    %16 = vector.load %arg12[%c16, %c0_11] : memref<64x256xf32, #tpu.memory_space<vmem>>, vector<8x256xf32>
    tpu.vector_store %arg12[%c16, %c0_11], %15 {strides = array<i32>} : memref<64x256xf32, #tpu.memory_space<vmem>>, vector<8x256xf32>,
    %17 = vector.extract_strided_slice %8 {offsets = [0, 768], sizes = [8, 256], strides = [1, 1]} : vector<8x1792xf32> to vector<8x256xf32>
    %c24 = arith.constant 24 : index
    %c0_12 = arith.constant 0 : index
    %18 = vector.load %arg12[%c24, %c0_12] : memref<64x256xf32, #tpu.memory_space<vmem>>, vector<8x256xf32>
    tpu.vector_store %arg12[%c24, %c0_12], %17 {strides = array<i32>} : memref<64x256xf32, #tpu.memory_space<vmem>>, vector<8x256xf32>,
    %19 = vector.extract_strided_slice %8 {offsets = [0, 1024], sizes = [8, 256], strides = [1, 1]} : vector<8x1792xf32> to vector<8x256xf32>
    %c32 = arith.constant 32 : index
    %c0_13 = arith.constant 0 : index
    %20 = vector.load %arg12[%c32, %c0_13] : memref<64x256xf32, #tpu.memory_space<vmem>>, vector<8x256xf32>
    tpu.vector_store %arg12[%c32, %c0_13], %19 {strides = array<i32>} : memref<64x256xf32, #tpu.memory_space<vmem>>, vector<8x256xf32>,
    %21 = vector.extract_strided_slice %8 {offsets = [0, 1280], sizes = [8, 256], strides = [1, 1]} : vector<8x1792xf32> to vector<8x256xf32>
    %c40 = arith.constant 40 : index
    %c0_14 = arith.constant 0 : index
    %22 = vector.load %arg12[%c40, %c0_14] : memref<64x256xf32, #tpu.memory_space<vmem>>, vector<8x256xf32>
    tpu.vector_store %arg12[%c40, %c0_14], %21 {strides = array<i32>} : memref<64x256xf32, #tpu.memory_space<vmem>>, vector<8x256xf32>,
    %23 = vector.extract_strided_slice %8 {offsets = [0, 1536], sizes = [8, 256], strides = [1, 1]} : vector<8x1792xf32> to vector<8x256xf32>
    %c48 = arith.constant 48 : index
    %c0_15 = arith.constant 0 : index
    %24 = vector.load %arg12[%c48, %c0_15] : memref<64x256xf32, #tpu.memory_space<vmem>>, vector<8x256xf32>
    tpu.vector_store %arg12[%c48, %c0_15], %23 {strides = array<i32>} : memref<64x256xf32, #tpu.memory_space<vmem>>, vector<8x256xf32>,
    %c0_16 = arith.constant 0 : index
    %c0_17 = arith.constant 0 : index
    %25 = vector.load %arg12[%c0_16, %c0_17] : memref<64x256xf32, #tpu.memory_space<vmem>>, vector<56x256xf32>
    %26 = arith.truncf %25 : vector<56x256xf32> to vector<56x256xbf16>
    %c8_18 = arith.constant 8 : index
    %c0_19 = arith.constant 0 : index
    %27 = vector.load %arg12[%c8_18, %c0_19] : memref<64x256xf32, #tpu.memory_space<vmem>>, vector<56x256xf32>
    %28 = arith.truncf %27 : vector<56x256xf32> to vector<56x256xbf16>
    %c0_20 = arith.constant 0 : index
    %c0_21 = arith.constant 0 : index
    %29 = vector.load %arg3[%c0_20, %c0_21] : memref<256x256xbf16, #tpu.memory_space<vmem>>, vector<256x256xbf16>
    %cst_22 = arith.constant dense<0.000000e+00> : vector<56x256xf32>
    %30 = tpu.matmul %26, %29, %cst_22 {dimension_numbers = #tpu.dot_dimension_numbers<[1], [0], [0], [1], [0, 0, 1, 1], [], []>} : vector<56x256xbf16>, vector<256x256xbf16>, vector<56x256xf32> -> vector<56x256xf32>
    %c0_23 = arith.constant 0 : index
    %c0_24 = arith.constant 0 : index
    %31 = vector.load %arg6[%c0_23, %c0_24] : memref<1x256xf32, #tpu.memory_space<vmem>>, vector<1x256xf32>
    %32 = vector.broadcast %31 : vector<1x256xf32> to vector<56x256xf32>
    %33 = arith.addf %30, %32 : vector<56x256xf32>
    %cst_25 = arith.constant 0.000000e+00 : f32
    %34 = vector.broadcast %cst_25 : f32 to vector<56x256xf32>
    %35 = arith.maximumf %33, %34 : vector<56x256xf32>
    %c0_26 = arith.constant 0 : index
    %c0_27 = arith.constant 0 : index
    %36 = vector.load %arg4[%c0_26, %c0_27] : memref<256x256xbf16, #tpu.memory_space<vmem>>, vector<256x256xbf16>
    %cst_28 = arith.constant dense<0.000000e+00> : vector<56x256xf32>
    %37 = tpu.matmul %26, %36, %cst_28 {dimension_numbers = #tpu.dot_dimension_numbers<[1], [0], [0], [1], [0, 0, 1, 1], [], []>} : vector<56x256xbf16>, vector<256x256xbf16>, vector<56x256xf32> -> vector<56x256xf32>
    %c0_29 = arith.constant 0 : index
    %c0_30 = arith.constant 0 : index
    %38 = vector.load %arg5[%c0_29, %c0_30] : memref<256x256xbf16, #tpu.memory_space<vmem>>, vector<256x256xbf16>
    %cst_31 = arith.constant dense<0.000000e+00> : vector<56x256xf32>
    %39 = tpu.matmul %28, %38, %cst_31 {dimension_numbers = #tpu.dot_dimension_numbers<[1], [0], [0], [1], [0, 0, 1, 1], [], []>} : vector<56x256xbf16>, vector<256x256xbf16>, vector<56x256xf32> -> vector<56x256xf32>
    %40 = arith.addf %37, %39 : vector<56x256xf32>
    %c0_32 = arith.constant 0 : index
    %c0_33 = arith.constant 0 : index
    %41 = vector.load %arg6[%c0_32, %c0_33] : memref<1x256xf32, #tpu.memory_space<vmem>>, vector<1x256xf32>
    %42 = vector.broadcast %41 : vector<1x256xf32> to vector<56x256xf32>
    %43 = arith.addf %40, %42 : vector<56x256xf32>
    %cst_34 = arith.constant 0.000000e+00 : f32
    %44 = vector.broadcast %cst_34 : f32 to vector<56x256xf32>
    %45 = arith.maximumf %43, %44 : vector<56x256xf32>
    %cst_35 = arith.constant 0.000000e+00 : f32
    %46 = vector.broadcast %cst_35 : f32 to vector<8x256xf32>
    %c56_36 = arith.constant 56 : index
    %c0_37 = arith.constant 0 : index
    %47 = vector.load %arg13[%c56_36, %c0_37] : memref<64x256xf32, #tpu.memory_space<vmem>>, vector<8x256xf32>
    tpu.vector_store %arg13[%c56_36, %c0_37], %46 {strides = array<i32>} : memref<64x256xf32, #tpu.memory_space<vmem>>, vector<8x256xf32>,
    %c0_38 = arith.constant 0 : index
    %c0_39 = arith.constant 0 : index
    %48 = vector.load %arg13[%c0_38, %c0_39] : memref<64x256xf32, #tpu.memory_space<vmem>>, vector<56x256xf32>
    tpu.vector_store %arg13[%c0_38, %c0_39], %35 {strides = array<i32>} : memref<64x256xf32, #tpu.memory_space<vmem>>, vector<56x256xf32>,
    %c8_40 = arith.constant 8 : index
    %c0_41 = arith.constant 0 : index
    %49 = vector.load %arg13[%c8_40, %c0_41] : memref<64x256xf32, #tpu.memory_space<vmem>>, vector<56x256xf32>
    %50 = arith.truncf %49 : vector<56x256xf32> to vector<56x256xbf16>
    %51 = arith.truncf %35 : vector<56x256xf32> to vector<56x256xbf16>
    %c0_42 = arith.constant 0 : index
    %c0_43 = arith.constant 0 : index
    %52 = vector.load %arg7[%c0_42, %c0_43] : memref<256x128xbf16, #tpu.memory_space<vmem>>, vector<256x128xbf16>
    %cst_44 = arith.constant dense<0.000000e+00> : vector<56x128xf32>
    %53 = tpu.matmul %51, %52, %cst_44 {dimension_numbers = #tpu.dot_dimension_numbers<[1], [0], [0], [1], [0, 0, 1, 1], [], []>} : vector<56x256xbf16>, vector<256x128xbf16>, vector<56x128xf32> -> vector<56x128xf32>
    %54 = arith.truncf %45 : vector<56x256xf32> to vector<56x256xbf16>
    %c0_45 = arith.constant 0 : index
    %c0_46 = arith.constant 0 : index
    %55 = vector.load %arg8[%c0_45, %c0_46] : memref<256x128xbf16, #tpu.memory_space<vmem>>, vector<256x128xbf16>
    %cst_47 = arith.constant dense<0.000000e+00> : vector<56x128xf32>
    %56 = tpu.matmul %54, %55, %cst_47 {dimension_numbers = #tpu.dot_dimension_numbers<[1], [0], [0], [1], [0, 0, 1, 1], [], []>} : vector<56x256xbf16>, vector<256x128xbf16>, vector<56x128xf32> -> vector<56x128xf32>
    %57 = arith.addf %53, %56 : vector<56x128xf32>
    %c0_48 = arith.constant 0 : index
    %c0_49 = arith.constant 0 : index
    %58 = vector.load %arg9[%c0_48, %c0_49] : memref<256x128xbf16, #tpu.memory_space<vmem>>, vector<256x128xbf16>
    %cst_50 = arith.constant dense<0.000000e+00> : vector<56x128xf32>
    %59 = tpu.matmul %50, %58, %cst_50 {dimension_numbers = #tpu.dot_dimension_numbers<[1], [0], [0], [1], [0, 0, 1, 1], [], []>} : vector<56x256xbf16>, vector<256x128xbf16>, vector<56x128xf32> -> vector<56x128xf32>
    %60 = arith.addf %57, %59 : vector<56x128xf32>
    %c0_51 = arith.constant 0 : index
    %c0_52 = arith.constant 0 : index
    %61 = vector.load %arg10[%c0_51, %c0_52] : memref<1x128xf32, #tpu.memory_space<vmem>>, vector<1x128xf32>
    %62 = vector.broadcast %61 : vector<1x128xf32> to vector<56x128xf32>
    %63 = arith.addf %60, %62 : vector<56x128xf32>
    %64 = math.absf %63 : vector<56x128xf32>
    %cst_53 = arith.constant 0.000000e+00 : f32
    %65 = vector.broadcast %cst_53 : f32 to vector<56x128xf32>
    %66 = arith.subf %65, %64 : vector<56x128xf32>
    %67 = math.exp %66 : vector<56x128xf32>
    %cst_54 = arith.constant 1.000000e+00 : f32
    %68 = vector.broadcast %cst_54 : f32 to vector<56x128xf32>
    %69 = arith.addf %68, %67 : vector<56x128xf32>
    %70 = tpu.reciprocal %69 {approx = true} : vector<56x128xf32> -> vector<56x128xf32>
    %cst_55 = arith.constant 0.000000e+00 : f32
    %71 = vector.broadcast %cst_55 : f32 to vector<56x128xf32>
    %72 = arith.cmpf oge, %63, %71 : vector<56x128xf32>
    %73 = arith.mulf %67, %70 : vector<56x128xf32>
    %74 = arith.select %72, %70, %73 : vector<56x128xi1>, vector<56x128xf32>
    %c0_56 = arith.constant 0 : index
    %c0_57 = arith.constant 0 : index
    %75 = vector.load %arg11[%c0_56, %c0_57] : memref<56x128xf32, #tpu.memory_space<vmem>>, vector<56x128xf32>
    tpu.vector_store %arg11[%c0_56, %c0_57], %74 {strides = array<i32>} : memref<56x128xf32, #tpu.memory_space<vmem>>, vector<56x128xf32>,
    return
  }
}

</mosaic_0001>

<llo_original>
// kernel: decoder_pallas.1
$region0: #{decoder_pallas.1}
  #allocation0 [shape = 'u32[]', space=smem, size = 0x4, offset = 0x4, fixed_abs, tag = 'smem constant byte address 0x4 - core index']
  #allocation1 [shape = 'u32[144,128]{1,0:T(1,128)}', space=vmem, size = 0x12000, scoped, tag = 'internal scratch']
  #allocation2 [shape = 'f32[64,256]{1,0:T(8,128)}', space=vmem, size = 0x10000, scoped, tag = 'scratch operand']
  #allocation3 [shape = 'f32[64,256]{1,0:T(8,128)}', space=vmem, size = 0x10000, scoped, tag = 'scratch operand']
  %s0 = inlined_call_operand.vmem [shape: f32[8,32], index: 0, kind: input, shape index: {}]
  %s1 = inlined_call_operand.hbm [shape: bf16[32,1792], index: 1, kind: input, shape index: {}]
  %s2 = inlined_call_operand.vmem [shape: f32[1,1792], index: 2, kind: input, shape index: {}]
  %s3 = inlined_call_operand.hbm [shape: bf16[256,256], index: 3, kind: input, shape index: {}]
  %s4 = inlined_call_operand.hbm [shape: bf16[256,256], index: 4, kind: input, shape index: {}]
  %s5 = inlined_call_operand.hbm [shape: bf16[256,256], index: 5, kind: input, shape index: {}]
  %s6 = inlined_call_operand.vmem [shape: f32[1,256], index: 6, kind: input, shape index: {}]
  %s7 = inlined_call_operand.hbm [shape: bf16[256,128], index: 7, kind: input, shape index: {}]
  %s8 = inlined_call_operand.hbm [shape: bf16[256,128], index: 8, kind: input, shape index: {}]
  %s9 = inlined_call_operand.hbm [shape: bf16[256,128], index: 9, kind: input, shape index: {}]
  %s10 = inlined_call_operand.vmem [shape: f32[1,128], index: 10, kind: input, shape index: {}]
  %s11 = inlined_call_operand.vmem [shape: f32[56,128], index: 11, kind: output, shape index: {}]
  %s12 = sld [smem:[#allocation0]]
  $region82: #{decoder_pallas.1} parent=0
    _
  %s14 = ssub.s32 1, %s12
  %s15 = scalar_select 0, %s14, %s12
  $region1: #{decoder_pallas.1} parent=0
    #allocation4 [shape = 'u8[114688]{0}', space=vmem, size = 0x1c000, scoped, tag = 'input window, operand 1, single buffered']
    #allocation5 [shape = 's32[1]{0}', space=sflag, size = 0x4, scoped, tag = 'scoped memory for decoder_pallas.1']
    #allocation6 [shape = 'u8[131072]{0}', space=vmem, size = 0x20000, scoped, tag = 'input window, operand 3, single buffered']
    #allocation7 [shape = 's32[1]{0}', space=sflag, size = 0x4, scoped, tag = 'scoped memory for decoder_pallas.1']
    #allocation8 [shape = 'u8[131072]{0}', space=vmem, size = 0x20000, scoped, tag = 'input window, operand 4, single buffered']
    #allocation9 [shape = 'u8[131072]{0}', space=vmem, size = 0x20000, scoped, tag = 'input window, operand 5, single buffered']
    #allocation10 [shape = 's32[1]{0}', space=sflag, size = 0x4, scoped, tag = 'scoped memory for decoder_pallas.1']
    #allocation11 [shape = 'u8[65536]{0}', space=vmem, size = 0x10000, scoped, tag = 'input window, operand 7, single buffered']
    #allocation12 [shape = 'u8[65536]{0}', space=vmem, size = 0x10000, scoped, tag = 'input window, operand 8, single buffered']
    #allocation13 [shape = 's32[1]{0}', space=sflag, size = 0x4, scoped, tag = 'scoped memory for decoder_pallas.1']
    #allocation14 [shape = 'u8[65536]{0}', space=vmem, size = 0x10000, scoped, tag = 'input window, operand 9, single buffered']
    %16 = vsyncpa [#allocation5], 0
    %17 = vsyncpa [#allocation7], 0
    %18 = vsyncpa [#allocation10], 0
    %19 = vsyncpa [#allocation13], 0
    // Predicated region
    $region2: #{decoder_pallas.1} parent=1 // pred_check
      _
    $region3: #{decoder_pallas.1} parent=1 // pred_check_branch
      %21 = sbr.rel (0) target = $region5
    $region4: #{decoder_pallas.1} parent=1 // pred_region
      _
    $region5: #{decoder_pallas.1} parent=1 // pred_fallthru
      _
    // Predicated region
    $region6: #{decoder_pallas.1} parent=1 // pred_check
      _
    $region7: #{decoder_pallas.1} parent=1 // pred_check_branch
      %23 = sbr.rel (0) target = $region9
    $region8: #{decoder_pallas.1} parent=1 // pred_region
      %s25 = ssub.s32 3584, 3584
      %26 = vsyncadd [#allocation5], %s25
      %s27 = sshll.u32 [#allocation4], 4
      %s28 = int_to_ptr.vmem [resolvable:$true] %s27
      %33 = dma.hbm_to_vmem [thread:$0]  %s1, 3584, %s28, [#allocation5], 896, 896, 56
    $region9: #{decoder_pallas.1} parent=1 // pred_fallthru
      _
    // Predicated region
    $region10: #{decoder_pallas.1} parent=1 // pred_check
      _
    $region11: #{decoder_pallas.1} parent=1 // pred_check_branch
      %35 = sbr.rel (0) target = $region13
    $region12: #{decoder_pallas.1} parent=1 // pred_region
      _
    $region13: #{decoder_pallas.1} parent=1 // pred_fallthru
      _
    // Predicated region
    $region14: #{decoder_pallas.1} parent=1 // pred_check
      _
    $region15: #{decoder_pallas.1} parent=1 // pred_check_branch
      %37 = sbr.rel (0) target = $region17
    $region16: #{decoder_pallas.1} parent=1 // pred_region
      %s39 = ssub.s32 4096, 4096
      %40 = vsyncadd [#allocation7], %s39
      %s41 = sshll.u32 [#allocation6], 4
      %s42 = int_to_ptr.vmem [resolvable:$true] %s41
      %47 = dma.hbm_to_vmem [thread:$0]  %s3, 4096, %s42, [#allocation7], 128, 128, 8
    $region17: #{decoder_pallas.1} parent=1 // pred_fallthru
      _
    // Predicated region
    $region18: #{decoder_pallas.1} parent=1 // pred_check
      _
    $region19: #{decoder_pallas.1} parent=1 // pred_check_branch
      %49 = sbr.rel (0) target = $region21
    $region20: #{decoder_pallas.1} parent=1 // pred_region
      %s51 = ssub.s32 4096, 4096
      %52 = vsyncadd [#allocation7], %s51
      %s53 = sshll.u32 [#allocation8], 4
      %s54 = int_to_ptr.vmem [resolvable:$true] %s53
      %59 = dma.hbm_to_vmem [thread:$0]  %s4, 4096, %s54, [#allocation7], 128, 128, 8
    $region21: #{decoder_pallas.1} parent=1 // pred_fallthru
      _
    // Predicated region
    $region22: #{decoder_pallas.1} parent=1 // pred_check
      _
    $region23: #{decoder_pallas.1} parent=1 // pred_check_branch
      %61 = sbr.rel (0) target = $region25
    $region24: #{decoder_pallas.1} parent=1 // pred_region
      %s63 = ssub.s32 4096, 4096
      %64 = vsyncadd [#allocation10], %s63
      %s65 = sshll.u32 [#allocation9], 4
      %s66 = int_to_ptr.vmem [resolvable:$true] %s65
      %71 = dma.hbm_to_vmem [thread:$0]  %s5, 4096, %s66, [#allocation10], 128, 128, 8
    $region25: #{decoder_pallas.1} parent=1 // pred_fallthru
      _
    // Predicated region
    $region26: #{decoder_pallas.1} parent=1 // pred_check
      _
    $region27: #{decoder_pallas.1} parent=1 // pred_check_branch
      %73 = sbr.rel (0) target = $region29
    $region28: #{decoder_pallas.1} parent=1 // pred_region
      _
    $region29: #{decoder_pallas.1} parent=1 // pred_fallthru
      _
    // Predicated region
    $region30: #{decoder_pallas.1} parent=1 // pred_check
      _
    $region31: #{decoder_pallas.1} parent=1 // pred_check_branch
      %75 = sbr.rel (0) target = $region33
    $region32: #{decoder_pallas.1} parent=1 // pred_region
      %s77 = ssub.s32 2048, 2048
      %78 = vsyncadd [#allocation10], %s77
      %s79 = sshll.u32 [#allocation11], 4
      %s80 = int_to_ptr.vmem [resolvable:$true] %s79
      %85 = dma.hbm_to_vmem [thread:$0]  %s7, 2048, %s80, [#allocation10], 64, 64, 4
    $region33: #{decoder_pallas.1} parent=1 // pred_fallthru
      _
    // Predicated region
    $region34: #{decoder_pallas.1} parent=1 // pred_check
      _
    $region35: #{decoder_pallas.1} parent=1 // pred_check_branch
      %87 = sbr.rel (0) target = $region37
    $region36: #{decoder_pallas.1} parent=1 // pred_region
      %s89 = ssub.s32 2048, 2048
      %90 = vsyncadd [#allocation13], %s89
      %s91 = sshll.u32 [#allocation12], 4
      %s92 = int_to_ptr.vmem [resolvable:$true] %s91
      %97 = dma.hbm_to_vmem [thread:$0]  %s8, 2048, %s92, [#allocation13], 64, 64, 4
    $region37: #{decoder_pallas.1} parent=1 // pred_fallthru
      _
    // Predicated region
    $region38: #{decoder_pallas.1} parent=1 // pred_check
      _
    $region39: #{decoder_pallas.1} parent=1 // pred_check_branch
      %99 = sbr.rel (0) target = $region41
    $region40: #{decoder_pallas.1} parent=1 // pred_region
      %s101 = ssub.s32 2048, 2048
      %102 = vsyncadd [#allocation13], %s101
      %s103 = sshll.u32 [#allocation14], 4
      %s104 = int_to_ptr.vmem [resolvable:$true] %s103
      %109 = dma.hbm_to_vmem [thread:$0]  %s9, 2048, %s104, [#allocation13], 64, 64, 4
    $region41: #{decoder_pallas.1} parent=1 // pred_fallthru
      _
    // Predicated region
    $region42: #{decoder_pallas.1} parent=1 // pred_check
      _
    $region43: #{decoder_pallas.1} parent=1 // pred_check_branch
      %111 = sbr.rel (0) target = $region45
    $region44: #{decoder_pallas.1} parent=1 // pred_region
      _
    $region45: #{decoder_pallas.1} parent=1 // pred_fallthru
      _
    // Predicated region
    $region46: #{decoder_pallas.1} parent=1 // pred_check
      _
    $region47: #{decoder_pallas.1} parent=1 // pred_check_branch
      %113 = sbr.rel (0) target = $region49
    $region48: #{decoder_pallas.1} parent=1 // pred_region
      %114 = dma.done [#allocation5], 3584
    $region49: #{decoder_pallas.1} parent=1 // pred_fallthru
      _
    // Predicated region
    $region50: #{decoder_pallas.1} parent=1 // pred_check
      _
    $region51: #{decoder_pallas.1} parent=1 // pred_check_branch
      %116 = sbr.rel (0) target = $region53
    $region52: #{decoder_pallas.1} parent=1 // pred_region
      %117 = dma.done [#allocation7], 4096
    $region53: #{decoder_pallas.1} parent=1 // pred_fallthru
      _
    // Predicated region
    $region54: #{decoder_pallas.1} parent=1 // pred_check
      _
    $region55: #{decoder_pallas.1} parent=1 // pred_check_branch
      %119 = sbr.rel (0) target = $region57
    $region56: #{decoder_pallas.1} parent=1 // pred_region
      %120 = dma.done [#allocation7], 4096
    $region57: #{decoder_pallas.1} parent=1 // pred_fallthru
      _
    // Predicated region
    $region58: #{decoder_pallas.1} parent=1 // pred_check
      _
    $region59: #{decoder_pallas.1} parent=1 // pred_check_branch
      %122 = sbr.rel (0) target = $region61
    $region60: #{decoder_pallas.1} parent=1 // pred_region
      %123 = dma.done [#allocation10], 4096
    $region61: #{decoder_pallas.1} parent=1 // pred_fallthru
      _
    // Predicated region
    $region62: #{decoder_pallas.1} parent=1 // pred_check
      _
    $region63: #{decoder_pallas.1} parent=1 // pred_check_branch
      %125 = sbr.rel (0) target = $region65
    $region64: #{decoder_pallas.1} parent=1 // pred_region
      %126 = dma.done [#allocation10], 2048
    $region65: #{decoder_pallas.1} parent=1 // pred_fallthru
      _
    // Predicated region
    $region66: #{decoder_pallas.1} parent=1 // pred_check
      _
    $region67: #{decoder_pallas.1} parent=1 // pred_check_branch
      %128 = sbr.rel (0) target = $region69
    $region68: #{decoder_pallas.1} parent=1 // pred_region
      %129 = dma.done [#allocation13], 2048
    $region69: #{decoder_pallas.1} parent=1 // pred_fallthru
      _
    // Predicated region
    $region70: #{decoder_pallas.1} parent=1 // pred_check
      _
    $region71: #{decoder_pallas.1} parent=1 // pred_check_branch
      %131 = sbr.rel (0) target = $region73
    $region72: #{decoder_pallas.1} parent=1 // pred_region
      %132 = dma.done [#allocation13], 2048
    $region73: #{decoder_pallas.1} parent=1 // pred_fallthru
      _
    %v134 = vld [vmem:[%s0] sm:$0xff]
    %v135 = vpack.c.bf16 %v134, %v134
    %v136 = vld [vmem:[#allocation4] sm:$0xff]
    %v137 = vld [vmem:[#allocation4 + $0x8] sm:$0xff]
    %v138 = vld [vmem:[#allocation4 + $0x10] sm:$0xff]
    %v139 = vld [vmem:[#allocation4 + $0x18] sm:$0xff]
    %v140 = vld [vmem:[#allocation4 + $0x20] sm:$0xff]
    %v141 = vld [vmem:[#allocation4 + $0x28] sm:$0xff]
    %v142 = vld [vmem:[#allocation4 + $0x30] sm:$0xff]
    %v143 = vld [vmem:[#allocation4 + $0x38] sm:$0xff]
    %v144 = vld [vmem:[#allocation4 + $0x40] sm:$0xff]
    %v145 = vld [vmem:[#allocation4 + $0x48] sm:$0xff]
    %v146 = vld [vmem:[#allocation4 + $0x50] sm:$0xff]
    %v147 = vld [vmem:[#allocation4 + $0x58] sm:$0xff]
    %v148 = vld [vmem:[#allocation4 + $0x60] sm:$0xff]
    %v149 = vld [vmem:[#allocation4 + $0x68] sm:$0xff]
    %v150 = vld [vmem:[#allocation4 + $0x70] sm:$0xff]
    %v151 = vld [vmem:[#allocation4 + $0x78] sm:$0xff]
    %v152 = vld [vmem:[#allocation4 + $0x80] sm:$0xff]
    %v153 = vld [vmem:[#allocation4 + $0x88] sm:$0xff]
    %v154 = vld [vmem:[#allocation4 + $0x90] sm:$0xff]
    %v155 = vld [vmem:[#allocation4 + $0x98] sm:$0xff]
    %v156 = vld [vmem:[#allocation4 + $0xa0] sm:$0xff]
    %v157 = vld [vmem:[#allocation4 + $0xa8] sm:$0xff]
    %v158 = vld [vmem:[#allocation4 + $0xb0] sm:$0xff]
    %v159 = vld [vmem:[#allocation4 + $0xb8] sm:$0xff]
    %v160 = vld [vmem:[#allocation4 + $0xc0] sm:$0xff]
    %v161 = vld [vmem:[#allocation4 + $0xc8] sm:$0xff]
    %v162 = vld [vmem:[#allocation4 + $0xd0] sm:$0xff]
    %v163 = vld [vmem:[#allocation4 + $0xd8] sm:$0xff]
    %v164 = vld [vmem:[%s2] sm:$0xff]
    %v165 = vld [vmem:[%s2 + $0x8] sm:$0x3f]
    %v168 = vlaneseq
    %v169 = vshrl.u32 %v168, 7
    %v170 = vsub.s32 0, %v169
    %v171 = vrot.slane %v164, %v170
    %v172 = vlaneseq
    %v173 = vshrl.u32 %v172, 7
    %v174 = vsub.s32 1, %v173
    %v175 = vrot.slane %v164, %v174
    %v176 = vlaneseq
    %v177 = vshrl.u32 %v176, 7
    %v178 = vsub.s32 2, %v177
    %v179 = vrot.slane %v164, %v178
    %v180 = vlaneseq
    %v181 = vshrl.u32 %v180, 7
    %v182 = vsub.s32 3, %v181
    %v183 = vrot.slane %v164, %v182
    %v184 = vlaneseq
    %v185 = vshrl.u32 %v184, 7
    %v186 = vsub.s32 4, %v185
    %v187 = vrot.slane %v164, %v186
    %v188 = vlaneseq
    %v189 = vshrl.u32 %v188, 7
    %v190 = vsub.s32 5, %v189
    %v191 = vrot.slane %v164, %v190
    %v192 = vlaneseq
    %v193 = vshrl.u32 %v192, 7
    %v194 = vsub.s32 6, %v193
    %v195 = vrot.slane %v164, %v194
    %v196 = vlaneseq
    %v197 = vshrl.u32 %v196, 7
    %v198 = vsub.s32 7, %v197
    %v199 = vrot.slane %v164, %v198
    %v200 = vlaneseq
    %v201 = vshrl.u32 %v200, 7
    %v202 = vsub.s32 0, %v201
    %v203 = vrot.slane %v165, %v202
    %v204 = vlaneseq
    %v205 = vshrl.u32 %v204, 7
    %v206 = vsub.s32 1, %v205
    %v207 = vrot.slane %v165, %v206
    %v208 = vlaneseq
    %v209 = vshrl.u32 %v208, 7
    %v210 = vsub.s32 2, %v209
    %v211 = vrot.slane %v165, %v210
    %v212 = vlaneseq
    %v213 = vshrl.u32 %v212, 7
    %v214 = vsub.s32 3, %v213
    %v215 = vrot.slane %v165, %v214
    %v216 = vlaneseq
    %v217 = vshrl.u32 %v216, 7
    %v218 = vsub.s32 4, %v217
    %v219 = vrot.slane %v165, %v218
    %v220 = vlaneseq
    %v221 = vshrl.u32 %v220, 7
    %v222 = vsub.s32 5, %v221
    %v223 = vrot.slane %v165, %v222
    %v266 = vunpack.c.l.b16 %v136
    %v267 = vunpack.c.h.b16 %v136
    %v268 = vunpack.c.l.b16 %v137
    %v269 = vunpack.c.h.b16 %v137
    %v270 = vunpack.c.l.b16 %v138
    %v271 = vunpack.c.h.b16 %v138
    %v272 = vunpack.c.l.b16 %v139
    %v273 = vunpack.c.h.b16 %v139
    %v274 = vunpack.c.l.b16 %v140
    %v275 = vunpack.c.h.b16 %v140
    %v276 = vunpack.c.l.b16 %v141
    %v277 = vunpack.c.h.b16 %v141
    %v278 = vunpack.c.l.b16 %v142
    %v279 = vunpack.c.h.b16 %v142
    %v280 = vunpack.c.l.b16 %v143
    %v281 = vunpack.c.h.b16 %v143
    %v282 = vunpack.c.l.b16 %v144
    %v283 = vunpack.c.h.b16 %v144
    %v284 = vunpack.c.l.b16 %v145
    %v285 = vunpack.c.h.b16 %v145
    %v286 = vunpack.c.l.b16 %v146
    %v287 = vunpack.c.h.b16 %v146
    %v288 = vunpack.c.l.b16 %v147
    %v289 = vunpack.c.h.b16 %v147
    %v290 = vunpack.c.l.b16 %v148
    %v291 = vunpack.c.h.b16 %v148
    %v292 = vunpack.c.l.b16 %v149
    %v293 = vunpack.c.h.b16 %v149
    %v294 = vunpack.c.l.b16 %v150
    %v295 = vunpack.c.h.b16 %v150
    %v296 = vunpack.c.l.b16 %v151
    %v297 = vunpack.c.h.b16 %v151
    %v298 = vunpack.c.l.b16 %v152
    %v299 = vunpack.c.h.b16 %v152
    %v300 = vunpack.c.l.b16 %v153
    %v301 = vunpack.c.h.b16 %v153
    %v302 = vunpack.c.l.b16 %v154
    %v303 = vunpack.c.h.b16 %v154
    %v304 = vunpack.c.l.b16 %v155
    %v305 = vunpack.c.h.b16 %v155
    %v306 = vunpack.c.l.b16 %v156
    %v307 = vunpack.c.h.b16 %v156
    %v308 = vunpack.c.l.b16 %v157
    %v309 = vunpack.c.h.b16 %v157
    %v310 = vunpack.c.l.b16 %v158
    %v311 = vunpack.c.h.b16 %v158
    %v312 = vunpack.c.l.b16 %v159
    %v313 = vunpack.c.h.b16 %v159
    %v314 = vunpack.c.l.b16 %v160
    %v315 = vunpack.c.h.b16 %v160
    %v316 = vunpack.c.l.b16 %v161
    %v317 = vunpack.c.h.b16 %v161
    %v318 = vunpack.c.l.b16 %v162
    %v319 = vunpack.c.h.b16 %v162
    %v320 = vunpack.c.l.b16 %v163
    %v321 = vunpack.c.h.b16 %v163
    %v322 = vpack.c.b16 %v280, %v266
    %v323 = vpack.c.b16 %v281, %v267
    %v324 = vpack.c.b16 %v282, %v268
    %v325 = vpack.c.b16 %v283, %v269
    %v326 = vpack.c.b16 %v284, %v270
    %v327 = vpack.c.b16 %v285, %v271
    %v328 = vpack.c.b16 %v286, %v272
    %v329 = vpack.c.b16 %v287, %v273
    %v330 = vpack.c.b16 %v288, %v274
    %v331 = vpack.c.b16 %v289, %v275
    %v332 = vpack.c.b16 %v290, %v276
    %v333 = vpack.c.b16 %v291, %v277
    %v334 = vpack.c.b16 %v292, %v278
    %v335 = vpack.c.b16 %v293, %v279
    %v336 = vpack.c.b16 %v308, %v294
    %v337 = vpack.c.b16 %v309, %v295
    %v338 = vpack.c.b16 %v310, %v296
    %v339 = vpack.c.b16 %v311, %v297
    %v340 = vpack.c.b16 %v312, %v298
    %v341 = vpack.c.b16 %v313, %v299
    %v342 = vpack.c.b16 %v314, %v300
    %v343 = vpack.c.b16 %v315, %v301
    %v344 = vpack.c.b16 %v316, %v302
    %v345 = vpack.c.b16 %v317, %v303
    %v346 = vpack.c.b16 %v318, %v304
    %v347 = vpack.c.b16 %v319, %v305
    %v348 = vpack.c.b16 %v320, %v306
    %v349 = vpack.c.b16 %v321, %v307
    %vm378 = vcmask 261120
    %v380 = vsel %vm378, %v135, 0
    %382 = vmatprep.subr.bf16.mxu0 %v323
    %383 = vmatpush1.bf16.msra.mxu0 %v322
    %384 = vmatprep.subr.bf16.mxu0 %v337
    %385 = vmatpush1.bf16.msra.mxu0 %v336
    %386 = vmatprep.subr.bf16.mxu0 0
    %387 = vmatpush1.bf16.msra.mxu0 0
    %388 = vmatprep.subr.bf16.mxu0 0
    %389 = vmatpush1.bf16.msra.mxu0 0
    %390 = vmatprep.subr.bf16.mxu0 0
    %391 = vmatpush1.bf16.msra.mxu0 0
    %392 = vmatprep.subr.bf16.mxu0 0
    %393 = vmatpush1.bf16.msra.mxu0 0
    %394 = vmatprep.subr.bf16.mxu0 0
    %395 = vmatpush1.bf16.msra.mxu0 0
    %396 = vmatprep.subr.bf16.mxu0 0
    %397 = vmatpush1.bf16.msra.mxu0 0
    %398 = vmatprep.subr.bf16.mxu0 0
    %399 = vmatpush1.bf16.msra.mxu0 0
    %400 = vmatprep.subr.bf16.mxu0 0
    %401 = vmatpush1.bf16.msra.mxu0 0
    %402 = vmatprep.subr.bf16.mxu0 0
    %403 = vmatpush1.bf16.msra.mxu0 0
    %404 = vmatprep.subr.bf16.mxu0 0
    %405 = vmatpush1.bf16.msra.mxu0 0
    %406 = vmatprep.subr.bf16.mxu0 0
    %407 = vmatpush1.bf16.msra.mxu0 0
    %408 = vmatprep.subr.bf16.mxu0 0
    %409 = vmatpush1.bf16.msra.mxu0 0
    %410 = vmatprep.subr.bf16.mxu0 0
    %411 = vmatpush1.bf16.msra.mxu0 0
    %412 = vmatprep.subr.bf16.mxu0 0
    %413 = vmatpush1.bf16.msra.mxu0 0
    %414 = vmatprep.mubr.bf16.mxu0 0
    %415 = vmatmul.mubr.bf16.gmra.mrb[0].mxu0 %v380
    %v416 = vpop.f32.mrb[0].mxu0
    %v417 = vadd.f32 %v171, %v416
    %v418 = vpop.f32.mrb[0].mxu0
    %v419 = vadd.f32 %v175, %v418
    %v420 = vpop.f32.mrb[0].mxu0
    %v421 = vpop.f32.mrb[0].mxu0
    %422 = vdwg.mxu0
    %423 = vmatprep.subr.bf16.mxu0 %v325
    %424 = vmatpush1.bf16.msra.mxu0 %v324
    %425 = vmatprep.subr.bf16.mxu0 %v339
    %426 = vmatpush1.bf16.msra.mxu0 %v338
    %427 = vmatprep.subr.bf16.mxu0 0
    %428 = vmatpush1.bf16.msra.mxu0 0
    %429 = vmatprep.subr.bf16.mxu0 0
    %430 = vmatpush1.bf16.msra.mxu0 0
    %431 = vmatprep.subr.bf16.mxu0 0
    %432 = vmatpush1.bf16.msra.mxu0 0
    %433 = vmatprep.subr.bf16.mxu0 0
    %434 = vmatpush1.bf16.msra.mxu0 0
    %435 = vmatprep.subr.bf16.mxu0 0
    %436 = vmatpush1.bf16.msra.mxu0 0
    %437 = vmatprep.subr.bf16.mxu0 0
    %438 = vmatpush1.bf16.msra.mxu0 0
    %439 = vmatprep.subr.bf16.mxu0 0
    %440 = vmatpush1.bf16.msra.mxu0 0
    %441 = vmatprep.subr.bf16.mxu0 0
    %442 = vmatpush1.bf16.msra.mxu0 0
    %443 = vmatprep.subr.bf16.mxu0 0
    %444 = vmatpush1.bf16.msra.mxu0 0
    %445 = vmatprep.subr.bf16.mxu0 0
    %446 = vmatpush1.bf16.msra.mxu0 0
    %447 = vmatprep.subr.bf16.mxu0 0
    %448 = vmatpush1.bf16.msra.mxu0 0
    %449 = vmatprep.subr.bf16.mxu0 0
    %450 = vmatpush1.bf16.msra.mxu0 0
    %451 = vmatprep.subr.bf16.mxu0 0
    %452 = vmatpush1.bf16.msra.mxu0 0
    %453 = vmatprep.subr.bf16.mxu0 0
    %454 = vmatpush1.bf16.msra.mxu0 0
    %455 = vmatprep.mubr.bf16.mxu0 0
    %456 = vmatmul.mubr.bf16.gmra.mrb[0].mxu0 %v380
    %v457 = vpop.f32.mrb[0].mxu0
    %v458 = vadd.f32 %v179, %v457
    %v459 = vpop.f32.mrb[0].mxu0
    %v460 = vadd.f32 %v183, %v459
    %v461 = vpop.f32.mrb[0].mxu0
    %v462 = vpop.f32.mrb[0].mxu0
    %463 = vdwg.mxu0
    %464 = vmatprep.subr.bf16.mxu0 %v327
    %465 = vmatpush1.bf16.msra.mxu0 %v326
    %466 = vmatprep.subr.bf16.mxu0 %v341
    %467 = vmatpush1.bf16.msra.mxu0 %v340
    %468 = vmatprep.subr.bf16.mxu0 0
    %469 = vmatpush1.bf16.msra.mxu0 0
    %470 = vmatprep.subr.bf16.mxu0 0
    %471 = vmatpush1.bf16.msra.mxu0 0
    %472 = vmatprep.subr.bf16.mxu0 0
    %473 = vmatpush1.bf16.msra.mxu0 0
    %474 = vmatprep.subr.bf16.mxu0 0
    %475 = vmatpush1.bf16.msra.mxu0 0
    %476 = vmatprep.subr.bf16.mxu0 0
    %477 = vmatpush1.bf16.msra.mxu0 0
    %478 = vmatprep.subr.bf16.mxu0 0
    %479 = vmatpush1.bf16.msra.mxu0 0
    %480 = vmatprep.subr.bf16.mxu0 0
    %481 = vmatpush1.bf16.msra.mxu0 0
    %482 = vmatprep.subr.bf16.mxu0 0
    %483 = vmatpush1.bf16.msra.mxu0 0
    %484 = vmatprep.subr.bf16.mxu0 0
    %485 = vmatpush1.bf16.msra.mxu0 0
    %486 = vmatprep.subr.bf16.mxu0 0
    %487 = vmatpush1.bf16.msra.mxu0 0
    %488 = vmatprep.subr.bf16.mxu0 0
    %489 = vmatpush1.bf16.msra.mxu0 0
    %490 = vmatprep.subr.bf16.mxu0 0
    %491 = vmatpush1.bf16.msra.mxu0 0
    %492 = vmatprep.subr.bf16.mxu0 0
    %493 = vmatpush1.bf16.msra.mxu0 0
    %494 = vmatprep.subr.bf16.mxu0 0
    %495 = vmatpush1.bf16.msra.mxu0 0
    %496 = vmatprep.mubr.bf16.mxu0 0
    %497 = vmatmul.mubr.bf16.gmra.mrb[0].mxu0 %v380
    %v498 = vpop.f32.mrb[0].mxu0
    %v499 = vadd.f32 %v187, %v498
    %v500 = vpop.f32.mrb[0].mxu0
    %v501 = vadd.f32 %v191, %v500
    %v502 = vpop.f32.mrb[0].mxu0
    %v503 = vpop.f32.mrb[0].mxu0
    %504 = vdwg.mxu0
    %505 = vmatprep.subr.bf16.mxu0 %v329
    %506 = vmatpush1.bf16.msra.mxu0 %v328
    %507 = vmatprep.subr.bf16.mxu0 %v343
    %508 = vmatpush1.bf16.msra.mxu0 %v342
    %509 = vmatprep.subr.bf16.mxu0 0
    %510 = vmatpush1.bf16.msra.mxu0 0
    %511 = vmatprep.subr.bf16.mxu0 0
    %512 = vmatpush1.bf16.msra.mxu0 0
    %513 = vmatprep.subr.bf16.mxu0 0
    %514 = vmatpush1.bf16.msra.mxu0 0
    %515 = vmatprep.subr.bf16.mxu0 0
    %516 = vmatpush1.bf16.msra.mxu0 0
    %517 = vmatprep.subr.bf16.mxu0 0
    %518 = vmatpush1.bf16.msra.mxu0 0
    %519 = vmatprep.subr.bf16.mxu0 0
    %520 = vmatpush1.bf16.msra.mxu0 0
    %521 = vmatprep.subr.bf16.mxu0 0
    %522 = vmatpush1.bf16.msra.mxu0 0
    %523 = vmatprep.subr.bf16.mxu0 0
    %524 = vmatpush1.bf16.msra.mxu0 0
    %525 = vmatprep.subr.bf16.mxu0 0
    %526 = vmatpush1.bf16.msra.mxu0 0
    %527 = vmatprep.subr.bf16.mxu0 0
    %528 = vmatpush1.bf16.msra.mxu0 0
    %529 = vmatprep.subr.bf16.mxu0 0
    %530 = vmatpush1.bf16.msra.mxu0 0
    %531 = vmatprep.subr.bf16.mxu0 0
    %532 = vmatpush1.bf16.msra.mxu0 0
    %533 = vmatprep.subr.bf16.mxu0 0
    %534 = vmatpush1.bf16.msra.mxu0 0
    %535 = vmatprep.subr.bf16.mxu0 0
    %536 = vmatpush1.bf16.msra.mxu0 0
    %537 = vmatprep.mubr.bf16.mxu0 0
    %538 = vmatmul.mubr.bf16.gmra.mrb[0].mxu0 %v380
    %v539 = vpop.f32.mrb[0].mxu0
    %v540 = vadd.f32 %v195, %v539
    %v541 = vpop.f32.mrb[0].mxu0
    %v542 = vadd.f32 %v199, %v541
    %v543 = vpop.f32.mrb[0].mxu0
    %v544 = vpop.f32.mrb[0].mxu0
    %545 = vdwg.mxu0
    %546 = vmatprep.subr.bf16.mxu0 %v331
    %547 = vmatpush1.bf16.msra.mxu0 %v330
    %548 = vmatprep.subr.bf16.mxu0 %v345
    %549 = vmatpush1.bf16.msra.mxu0 %v344
    %550 = vmatprep.subr.bf16.mxu0 0
    %551 = vmatpush1.bf16.msra.mxu0 0
    %552 = vmatprep.subr.bf16.mxu0 0
    %553 = vmatpush1.bf16.msra.mxu0 0
    %554 = vmatprep.subr.bf16.mxu0 0
    %555 = vmatpush1.bf16.msra.mxu0 0
    %556 = vmatprep.subr.bf16.mxu0 0
    %557 = vmatpush1.bf16.msra.mxu0 0
    %558 = vmatprep.subr.bf16.mxu0 0
    %559 = vmatpush1.bf16.msra.mxu0 0
    %560 = vmatprep.subr.bf16.mxu0 0
    %561 = vmatpush1.bf16.msra.mxu0 0
    %562 = vmatprep.subr.bf16.mxu0 0
    %563 = vmatpush1.bf16.msra.mxu0 0
    %564 = vmatprep.subr.bf16.mxu0 0
    %565 = vmatpush1.bf16.msra.mxu0 0
    %566 = vmatprep.subr.bf16.mxu0 0
    %567 = vmatpush1.bf16.msra.mxu0 0
    %568 = vmatprep.subr.bf16.mxu0 0
    %569 = vmatpush1.bf16.msra.mxu0 0
    %570 = vmatprep.subr.bf16.mxu0 0
    %571 = vmatpush1.bf16.msra.mxu0 0
    %572 = vmatprep.subr.bf16.mxu0 0
    %573 = vmatpush1.bf16.msra.mxu0 0
    %574 = vmatprep.subr.bf16.mxu0 0
    %575 = vmatpush1.bf16.msra.mxu0 0
    %576 = vmatprep.subr.bf16.mxu0 0
    %577 = vmatpush1.bf16.msra.mxu0 0
    %578 = vmatprep.mubr.bf16.mxu0 0
    %579 = vmatmul.mubr.bf16.gmra.mrb[0].mxu0 %v380
    %v580 = vpop.f32.mrb[0].mxu0
    %v581 = vadd.f32 %v203, %v580
    %v582 = vpop.f32.mrb[0].mxu0
    %v583 = vadd.f32 %v207, %v582
    %v584 = vpop.f32.mrb[0].mxu0
    %v585 = vpop.f32.mrb[0].mxu0
    %586 = vdwg.mxu0
    %587 = vmatprep.subr.bf16.mxu0 %v333
    %588 = vmatpush1.bf16.msra.mxu0 %v332
    %589 = vmatprep.subr.bf16.mxu0 %v347
    %590 = vmatpush1.bf16.msra.mxu0 %v346
    %591 = vmatprep.subr.bf16.mxu0 0
    %592 = vmatpush1.bf16.msra.mxu0 0
    %593 = vmatprep.subr.bf16.mxu0 0
    %594 = vmatpush1.bf16.msra.mxu0 0
    %595 = vmatprep.subr.bf16.mxu0 0
    %596 = vmatpush1.bf16.msra.mxu0 0
    %597 = vmatprep.subr.bf16.mxu0 0
    %598 = vmatpush1.bf16.msra.mxu0 0
    %599 = vmatprep.subr.bf16.mxu0 0
    %600 = vmatpush1.bf16.msra.mxu0 0
    %601 = vmatprep.subr.bf16.mxu0 0
    %602 = vmatpush1.bf16.msra.mxu0 0
    %603 = vmatprep.subr.bf16.mxu0 0
    %604 = vmatpush1.bf16.msra.mxu0 0
    %605 = vmatprep.subr.bf16.mxu0 0
    %606 = vmatpush1.bf16.msra.mxu0 0
    %607 = vmatprep.subr.bf16.mxu0 0
    %608 = vmatpush1.bf16.msra.mxu0 0
    %609 = vmatprep.subr.bf16.mxu0 0
    %610 = vmatpush1.bf16.msra.mxu0 0
    %611 = vmatprep.subr.bf16.mxu0 0
    %612 = vmatpush1.bf16.msra.mxu0 0
    %613 = vmatprep.subr.bf16.mxu0 0
    %614 = vmatpush1.bf16.msra.mxu0 0
    %615 = vmatprep.subr.bf16.mxu0 0
    %616 = vmatpush1.bf16.msra.mxu0 0
    %617 = vmatprep.subr.bf16.mxu0 0
    %618 = vmatpush1.bf16.msra.mxu0 0
    %619 = vmatprep.mubr.bf16.mxu0 0
    %620 = vmatmul.mubr.bf16.gmra.mrb[0].mxu0 %v380
    %v621 = vpop.f32.mrb[0].mxu0
    %v622 = vadd.f32 %v211, %v621
    %v623 = vpop.f32.mrb[0].mxu0
    %v624 = vadd.f32 %v215, %v623
    %v625 = vpop.f32.mrb[0].mxu0
    %v626 = vpop.f32.mrb[0].mxu0
    %627 = vdwg.mxu0
    %628 = vmatprep.subr.bf16.mxu0 %v335
    %629 = vmatpush1.bf16.msra.mxu0 %v334
    %630 = vmatprep.subr.bf16.mxu0 %v349
    %631 = vmatpush1.bf16.msra.mxu0 %v348
    %632 = vmatprep.subr.bf16.mxu0 0
    %633 = vmatpush1.bf16.msra.mxu0 0
    %634 = vmatprep.subr.bf16.mxu0 0
    %635 = vmatpush1.bf16.msra.mxu0 0
    %636 = vmatprep.subr.bf16.mxu0 0
    %637 = vmatpush1.bf16.msra.mxu0 0
    %638 = vmatprep.subr.bf16.mxu0 0
    %639 = vmatpush1.bf16.msra.mxu0 0
    %640 = vmatprep.subr.bf16.mxu0 0
    %641 = vmatpush1.bf16.msra.mxu0 0
    %642 = vmatprep.subr.bf16.mxu0 0
    %643 = vmatpush1.bf16.msra.mxu0 0
    %644 = vmatprep.subr.bf16.mxu0 0
    %645 = vmatpush1.bf16.msra.mxu0 0
    %646 = vmatprep.subr.bf16.mxu0 0
    %647 = vmatpush1.bf16.msra.mxu0 0
    %648 = vmatprep.subr.bf16.mxu0 0
    %649 = vmatpush1.bf16.msra.mxu0 0
    %650 = vmatprep.subr.bf16.mxu0 0
    %651 = vmatpush1.bf16.msra.mxu0 0
    %652 = vmatprep.subr.bf16.mxu0 0
    %653 = vmatpush1.bf16.msra.mxu0 0
    %654 = vmatprep.subr.bf16.mxu0 0
    %655 = vmatpush1.bf16.msra.mxu0 0
    %656 = vmatprep.subr.bf16.mxu0 0
    %657 = vmatpush1.bf16.msra.mxu0 0
    %658 = vmatprep.subr.bf16.mxu0 0
    %659 = vmatpush1.bf16.msra.mxu0 0
    %660 = vmatprep.mubr.bf16.mxu0 0
    %661 = vmatmul.mubr.bf16.gmra.mrb[0].mxu0 %v380
    %v662 = vpop.f32.mrb[0].mxu0
    %v663 = vadd.f32 %v219, %v662
    %v664 = vpop.f32.mrb[0].mxu0
    %v665 = vadd.f32 %v223, %v664
    %v666 = vpop.f32.mrb[0].mxu0
    %v667 = vpop.f32.mrb[0].mxu0
    %668 = vdwg.mxu0
    %v669 = vmax.f32 %v417, 0.0
    %v670 = vmax.f32 %v419, 0.0
    %v671 = vmax.f32 %v458, 0.0
    %v672 = vmax.f32 %v460, 0.0
    %v673 = vmax.f32 %v499, 0.0
    %v674 = vmax.f32 %v501, 0.0
    %v675 = vmax.f32 %v540, 0.0
    %v676 = vmax.f32 %v542, 0.0
    %v677 = vmax.f32 %v581, 0.0
    %v678 = vmax.f32 %v583, 0.0
    %v679 = vmax.f32 %v622, 0.0
    %v680 = vmax.f32 %v624, 0.0
    %v681 = vmax.f32 %v663, 0.0
    %v682 = vmax.f32 %v665, 0.0
    %683 = vst [vmem:[#allocation2 + $0x70] sm:$0xff] 0.0
    %684 = vst [vmem:[#allocation2 + $0x78] sm:$0xff] 0.0
    %685 = vst [vmem:[#allocation2] sm:$0xff] %v669
    %686 = vst [vmem:[#allocation2 + $0x8] sm:$0xff] %v670
    %687 = vst [vmem:[#allocation2 + $0x10] sm:$0xff] %v671
    %688 = vst [vmem:[#allocation2 + $0x18] sm:$0xff] %v672
    %689 = vst [vmem:[#allocation2 + $0x20] sm:$0xff] %v673
    %690 = vst [vmem:[#allocation2 + $0x28] sm:$0xff] %v674
    %691 = vst [vmem:[#allocation2 + $0x30] sm:$0xff] %v675
    %692 = vst [vmem:[#allocation2 + $0x38] sm:$0xff] %v676
    %693 = vst [vmem:[#allocation2 + $0x40] sm:$0xff] %v677
    %694 = vst [vmem:[#allocation2 + $0x48] sm:$0xff] %v678
    %695 = vst [vmem:[#allocation2 + $0x50] sm:$0xff] %v679
    %696 = vst [vmem:[#allocation2 + $0x58] sm:$0xff] %v680
    %697 = vst [vmem:[#allocation2 + $0x60] sm:$0xff] %v681
    %698 = vst [vmem:[#allocation2 + $0x68] sm:$0xff] %v682
    %v699 = vld [vmem:[#allocation2] sm:$0xff]
    %v700 = vld [vmem:[#allocation2 + $0x8] sm:$0xff]
    %v701 = vld [vmem:[#allocation2 + $0x10] sm:$0xff]
    %v702 = vld [vmem:[#allocation2 + $0x18] sm:$0xff]
    %v703 = vld [vmem:[#allocation2 + $0x20] sm:$0xff]
    %v704 = vld [vmem:[#allocation2 + $0x28] sm:$0xff]
    %v705 = vld [vmem:[#allocation2 + $0x30] sm:$0xff]
    %v706 = vld [vmem:[#allocation2 + $0x38] sm:$0xff]
    %v707 = vld [vmem:[#allocation2 + $0x40] sm:$0xff]
    %v708 = vld [vmem:[#allocation2 + $0x48] sm:$0xff]
    %v709 = vld [vmem:[#allocation2 + $0x50] sm:$0xff]
    %v710 = vld [vmem:[#allocation2 + $0x58] sm:$0xff]
    %v711 = vld [vmem:[#allocation2 + $0x60] sm:$0xff]
    %v712 = vld [vmem:[#allocation2 + $0x68] sm:$0xff]
    %v713 = vpack.c.bf16 %v701, %v699
    %v714 = vpack.c.bf16 %v702, %v700
    %v715 = vpack.c.bf16 %v705, %v703
    %v716 = vpack.c.bf16 %v706, %v704
    %v717 = vpack.c.bf16 %v709, %v707
    %v718 = vpack.c.bf16 %v710, %v708
    %v719 = vpack.c.bf16 %v711, %v711
    %v720 = vpack.c.bf16 %v712, %v712
    %v721 = vld [vmem:[#allocation2 + $0x10] sm:$0xff]
    %v722 = vld [vmem:[#allocation2 + $0x18] sm:$0xff]
    %v723 = vld [vmem:[#allocation2 + $0x20] sm:$0xff]
    %v724 = vld [vmem:[#allocation2 + $0x28] sm:$0xff]
    %v725 = vld [vmem:[#allocation2 + $0x30] sm:$0xff]
    %v726 = vld [vmem:[#allocation2 + $0x38] sm:$0xff]
    %v727 = vld [vmem:[#allocation2 + $0x40] sm:$0xff]
    %v728 = vld [vmem:[#allocation2 + $0x48] sm:$0xff]
    %v729 = vld [vmem:[#allocation2 + $0x50] sm:$0xff]
    %v730 = vld [vmem:[#allocation2 + $0x58] sm:$0xff]
    %v731 = vld [vmem:[#allocation2 + $0x60] sm:$0xff]
    %v732 = vld [vmem:[#allocation2 + $0x68] sm:$0xff]
    %v733 = vld [vmem:[#allocation2 + $0x70] sm:$0xff]
    %v734 = vld [vmem:[#allocation2 + $0x78] sm:$0xff]
    %v735 = vpack.c.bf16 %v723, %v721
    %v736 = vpack.c.bf16 %v724, %v722
    %v737 = vpack.c.bf16 %v727, %v725
    %v738 = vpack.c.bf16 %v728, %v726
    %v739 = vpack.c.bf16 %v731, %v729
    %v740 = vpack.c.bf16 %v732, %v730
    %v741 = vpack.c.bf16 %v733, %v733
    %v742 = vpack.c.bf16 %v734, %v734
    %v743 = vld [vmem:[#allocation6] sm:$0xff]
    %v744 = vld [vmem:[#allocation6 + $0x8] sm:$0xff]
    %v745 = vld [vmem:[#allocation6 + $0x10] sm:$0xff]
    %v746 = vld [vmem:[#allocation6 + $0x18] sm:$0xff]
    %v747 = vld [vmem:[#allocation6 + $0x20] sm:$0xff]
    %v748 = vld [vmem:[#allocation6 + $0x28] sm:$0xff]
    %v749 = vld [vmem:[#allocation6 + $0x30] sm:$0xff]
    %v750 = vld [vmem:[#allocation6 + $0x38] sm:$0xff]
    %v751 = vld [vmem:[#allocation6 + $0x40] sm:$0xff]
    %v752 = vld [vmem:[#allocation6 + $0x48] sm:$0xff]
    %v753 = vld [vmem:[#allocation6 + $0x50] sm:$0xff]
    %v754 = vld [vmem:[#allocation6 + $0x58] sm:$0xff]
    %v755 = vld [vmem:[#allocation6 + $0x60] sm:$0xff]
    %v756 = vld [vmem:[#allocation6 + $0x68] sm:$0xff]
    %v757 = vld [vmem:[#allocation6 + $0x70] sm:$0xff]
    %v758 = vld [vmem:[#allocation6 + $0x78] sm:$0xff]
    %v759 = vld [vmem:[#allocation6 + $0x80] sm:$0xff]
    %v760 = vld [vmem:[#allocation6 + $0x88] sm:$0xff]
    %v761 = vld [vmem:[#allocation6 + $0x90] sm:$0xff]
    %v762 = vld [vmem:[#allocation6 + $0x98] sm:$0xff]
    %v763 = vld [vmem:[#allocation6 + $0xa0] sm:$0xff]
    %v764 = vld [vmem:[#allocation6 + $0xa8] sm:$0xff]
    %v765 = vld [vmem:[#allocation6 + $0xb0] sm:$0xff]
    %v766 = vld [vmem:[#allocation6 + $0xb8] sm:$0xff]
    %v767 = vld [vmem:[#allocation6 + $0xc0] sm:$0xff]
    %v768 = vld [vmem:[#allocation6 + $0xc8] sm:$0xff]
    %v769 = vld [vmem:[#allocation6 + $0xd0] sm:$0xff]
    %v770 = vld [vmem:[#allocation6 + $0xd8] sm:$0xff]
    %v771 = vld [vmem:[#allocation6 + $0xe0] sm:$0xff]
    %v772 = vld [vmem:[#allocation6 + $0xe8] sm:$0xff]
    %v773 = vld [vmem:[#allocation6 + $0xf0] sm:$0xff]
    %v774 = vld [vmem:[#allocation6 + $0xf8] sm:$0xff]
    %v775 = vld [vmem:[%s6] sm:$0x3]
    %v777 = vlaneseq
    %v778 = vshrl.u32 %v777, 7
    %v779 = vsub.s32 0, %v778
    %v780 = vrot.slane %v775, %v779
    %v781 = vlaneseq
    %v782 = vshrl.u32 %v781, 7
    %v783 = vsub.s32 1, %v782
    %v784 = vrot.slane %v775, %v783
    %v819 = vunpack.c.l.b16 %v743
    %v820 = vunpack.c.h.b16 %v743
    %v821 = vunpack.c.l.b16 %v744
    %v822 = vunpack.c.h.b16 %v744
    %v823 = vunpack.c.l.b16 %v745
    %v824 = vunpack.c.h.b16 %v745
    %v825 = vunpack.c.l.b16 %v746
    %v826 = vunpack.c.h.b16 %v746
    %v827 = vunpack.c.l.b16 %v747
    %v828 = vunpack.c.h.b16 %v747
    %v829 = vunpack.c.l.b16 %v748
    %v830 = vunpack.c.h.b16 %v748
    %v831 = vunpack.c.l.b16 %v749
    %v832 = vunpack.c.h.b16 %v749
    %v833 = vunpack.c.l.b16 %v750
    %v834 = vunpack.c.h.b16 %v750
    %v835 = vunpack.c.l.b16 %v751
    %v836 = vunpack.c.h.b16 %v751
    %v837 = vunpack.c.l.b16 %v752
    %v838 = vunpack.c.h.b16 %v752
    %v839 = vunpack.c.l.b16 %v753
    %v840 = vunpack.c.h.b16 %v753
    %v841 = vunpack.c.l.b16 %v754
    %v842 = vunpack.c.h.b16 %v754
    %v843 = vunpack.c.l.b16 %v755
    %v844 = vunpack.c.h.b16 %v755
    %v845 = vunpack.c.l.b16 %v756
    %v846 = vunpack.c.h.b16 %v756
    %v847 = vunpack.c.l.b16 %v757
    %v848 = vunpack.c.h.b16 %v757
    %v849 = vunpack.c.l.b16 %v758
    %v850 = vunpack.c.h.b16 %v758
    %v851 = vunpack.c.l.b16 %v759
    %v852 = vunpack.c.h.b16 %v759
    %v853 = vunpack.c.l.b16 %v760
    %v854 = vunpack.c.h.b16 %v760
    %v855 = vunpack.c.l.b16 %v761
    %v856 = vunpack.c.h.b16 %v761
    %v857 = vunpack.c.l.b16 %v762
    %v858 = vunpack.c.h.b16 %v762
    %v859 = vunpack.c.l.b16 %v763
    %v860 = vunpack.c.h.b16 %v763
    %v861 = vunpack.c.l.b16 %v764
    %v862 = vunpack.c.h.b16 %v764
    %v863 = vunpack.c.l.b16 %v765
    %v864 = vunpack.c.h.b16 %v765
    %v865 = vunpack.c.l.b16 %v766
    %v866 = vunpack.c.h.b16 %v766
    %v867 = vunpack.c.l.b16 %v767
    %v868 = vunpack.c.h.b16 %v767
    %v869 = vunpack.c.l.b16 %v768
    %v870 = vunpack.c.h.b16 %v768
    %v871 = vunpack.c.l.b16 %v769
    %v872 = vunpack.c.h.b16 %v769
    %v873 = vunpack.c.l.b16 %v770
    %v874 = vunpack.c.h.b16 %v770
    %v875 = vunpack.c.l.b16 %v771
    %v876 = vunpack.c.h.b16 %v771
    %v877 = vunpack.c.l.b16 %v772
    %v878 = vunpack.c.h.b16 %v772
    %v879 = vunpack.c.l.b16 %v773
    %v880 = vunpack.c.h.b16 %v773
    %v881 = vunpack.c.l.b16 %v774
    %v882 = vunpack.c.h.b16 %v774
    %v883 = vpack.c.b16 %v821, %v819
    %v884 = vpack.c.b16 %v822, %v820
    %v885 = vpack.c.b16 %v825, %v823
    %v886 = vpack.c.b16 %v826, %v824
    %v887 = vpack.c.b16 %v829, %v827
    %v888 = vpack.c.b16 %v830, %v828
    %v889 = vpack.c.b16 %v833, %v831
    %v890 = vpack.c.b16 %v834, %v832
    %v891 = vpack.c.b16 %v837, %v835
    %v892 = vpack.c.b16 %v838, %v836
    %v893 = vpack.c.b16 %v841, %v839
    %v894 = vpack.c.b16 %v842, %v840
    %v895 = vpack.c.b16 %v845, %v843
    %v896 = vpack.c.b16 %v846, %v844
    %v897 = vpack.c.b16 %v849, %v847
    %v898 = vpack.c.b16 %v850, %v848
    %v899 = vpack.c.b16 %v853, %v851
    %v900 = vpack.c.b16 %v854, %v852
    %v901 = vpack.c.b16 %v857, %v855
    %v902 = vpack.c.b16 %v858, %v856
    %v903 = vpack.c.b16 %v861, %v859
    %v904 = vpack.c.b16 %v862, %v860
    %v905 = vpack.c.b16 %v865, %v863
    %v906 = vpack.c.b16 %v866, %v864
    %v907 = vpack.c.b16 %v869, %v867
    %v908 = vpack.c.b16 %v870, %v868
    %v909 = vpack.c.b16 %v873, %v871
    %v910 = vpack.c.b16 %v874, %v872
    %v911 = vpack.c.b16 %v877, %v875
    %v912 = vpack.c.b16 %v878, %v876
    %v913 = vpack.c.b16 %v881, %v879
    %v914 = vpack.c.b16 %v882, %v880
    %947 = vmatprep.subr.bf16.mxu0 %v884
    %948 = vmatpush1.bf16.msra.mxu0 %v883
    %949 = vmatprep.subr.bf16.mxu0 %v886
    %950 = vmatpush1.bf16.msra.mxu0 %v885
    %951 = vmatprep.subr.bf16.mxu0 %v888
    %952 = vmatpush1.bf16.msra.mxu0 %v887
    %953 = vmatprep.subr.bf16.mxu0 %v890
    %954 = vmatpush1.bf16.msra.mxu0 %v889
    %955 = vmatprep.subr.bf16.mxu0 %v892
    %956 = vmatpush1.bf16.msra.mxu0 %v891
    %957 = vmatprep.subr.bf16.mxu0 %v894
    %958 = vmatpush1.bf16.msra.mxu0 %v893
    %959 = vmatprep.subr.bf16.mxu0 %v896
    %960 = vmatpush1.bf16.msra.mxu0 %v895
    %961 = vmatprep.subr.bf16.mxu0 %v898
    %962 = vmatpush1.bf16.msra.mxu0 %v897
    %963 = vmatprep.subr.bf16.mxu0 %v900
    %964 = vmatpush1.bf16.msra.mxu0 %v899
    %965 = vmatprep.subr.bf16.mxu0 %v902
    %966 = vmatpush1.bf16.msra.mxu0 %v901
    %967 = vmatprep.subr.bf16.mxu0 %v904
    %968 = vmatpush1.bf16.msra.mxu0 %v903
    %969 = vmatprep.subr.bf16.mxu0 %v906
    %970 = vmatpush1.bf16.msra.mxu0 %v905
    %971 = vmatprep.subr.bf16.mxu0 %v908
    %972 = vmatpush1.bf16.msra.mxu0 %v907
    %973 = vmatprep.subr.bf16.mxu0 %v910
    %974 = vmatpush1.bf16.msra.mxu0 %v909
    %975 = vmatprep.subr.bf16.mxu0 %v912
    %976 = vmatpush1.bf16.msra.mxu0 %v911
    %977 = vmatprep.subr.bf16.mxu0 %v914
    %978 = vmatpush1.bf16.msra.mxu0 %v913
    %979 = vmatprep.mubr.bf16.mxu0 %v714
    %980 = vmatmul.mubr.bf16.gmra.mrb[0].mxu0 %v713
    %v981 = vpop.f32.mrb[0].mxu0
    %v982 = vadd.f32 %v780, %v981
    %v983 = vpop.f32.mrb[0].mxu0
    %v984 = vadd.f32 %v784, %v983
    %v985 = vpop.f32.mrb[0].mxu0
    %v986 = vadd.f32 %v780, %v985
    %v987 = vpop.f32.mrb[0].mxu0
    %v988 = vadd.f32 %v784, %v987
    %989 = vmatprep.mubr.bf16.mxu0 %v716
    %990 = vmatmul.mubr.bf16.gmra.mrb[0].mxu0 %v715
    %v991 = vpop.f32.mrb[0].mxu0
    %v992 = vadd.f32 %v780, %v991
    %v993 = vpop.f32.mrb[0].mxu0
    %v994 = vadd.f32 %v784, %v993
    %v995 = vpop.f32.mrb[0].mxu0
    %v996 = vadd.f32 %v780, %v995
    %v997 = vpop.f32.mrb[0].mxu0
    %v998 = vadd.f32 %v784, %v997
    %999 = vmatprep.mubr.bf16.mxu0 %v718
    %1000 = vmatmul.mubr.bf16.gmra.mrb[0].mxu0 %v717
    %v1001 = vpop.f32.mrb[0].mxu0
    %v1002 = vadd.f32 %v780, %v1001
    %v1003 = vpop.f32.mrb[0].mxu0
    %v1004 = vadd.f32 %v784, %v1003
    %v1005 = vpop.f32.mrb[0].mxu0
    %v1006 = vadd.f32 %v780, %v1005
    %v1007 = vpop.f32.mrb[0].mxu0
    %v1008 = vadd.f32 %v784, %v1007
    %1009 = vmatprep.mubr.bf16.mxu0 %v720
    %1010 = vmatmul.mubr.bf16.gmra.mrb[0].mxu0 %v719
    %v1011 = vpop.f32.mrb[0].mxu0
    %v1012 = vadd.f32 %v780, %v1011
    %v1013 = vpop.f32.mrb[0].mxu0
    %v1014 = vadd.f32 %v784, %v1013
    %v1015 = vpop.f32.mrb[0].mxu0
    %v1016 = vpop.f32.mrb[0].mxu0
    %1017 = vdwg.mxu0
    %v1018 = vmax.f32 %v982, 0.0
    %v1019 = vmax.f32 %v984, 0.0
    %v1020 = vmax.f32 %v986, 0.0
    %v1021 = vmax.f32 %v988, 0.0
    %v1022 = vmax.f32 %v992, 0.0
    %v1023 = vmax.f32 %v994, 0.0
    %v1024 = vmax.f32 %v996, 0.0
    %v1025 = vmax.f32 %v998, 0.0
    %v1026 = vmax.f32 %v1002, 0.0
    %v1027 = vmax.f32 %v1004, 0.0
    %v1028 = vmax.f32 %v1006, 0.0
    %v1029 = vmax.f32 %v1008, 0.0
    %v1030 = vmax.f32 %v1012, 0.0
    %v1031 = vmax.f32 %v1014, 0.0
    %v1032 = vld [vmem:[#allocation8] sm:$0xff]
    %v1033 = vld [vmem:[#allocation8 + $0x8] sm:$0xff]
    %v1034 = vld [vmem:[#allocation8 + $0x10] sm:$0xff]
    %v1035 = vld [vmem:[#allocation8 + $0x18] sm:$0xff]
    %v1036 = vld [vmem:[#allocation8 + $0x20] sm:$0xff]
    %v1037 = vld [vmem:[#allocation8 + $0x28] sm:$0xff]
    %v1038 = vld [vmem:[#allocation8 + $0x30] sm:$0xff]
    %v1039 = vld [vmem:[#allocation8 + $0x38] sm:$0xff]
    %v1040 = vld [vmem:[#allocation8 + $0x40] sm:$0xff]
    %v1041 = vld [vmem:[#allocation8 + $0x48] sm:$0xff]
    %v1042 = vld [vmem:[#allocation8 + $0x50] sm:$0xff]
    %v1043 = vld [vmem:[#allocation8 + $0x58] sm:$0xff]
    %v1044 = vld [vmem:[#allocation8 + $0x60] sm:$0xff]
    %v1045 = vld [vmem:[#allocation8 + $0x68] sm:$0xff]
    %v1046 = vld [vmem:[#allocation8 + $0x70] sm:$0xff]
    %v1047 = vld [vmem:[#allocation8 + $0x78] sm:$0xff]
    %v1048 = vld [vmem:[#allocation8 + $0x80] sm:$0xff]
    %v1049 = vld [vmem:[#allocation8 + $0x88] sm:$0xff]
    %v1050 = vld [vmem:[#allocation8 + $0x90] sm:$0xff]
    %v1051 = vld [vmem:[#allocation8 + $0x98] sm:$0xff]
    %v1052 = vld [vmem:[#allocation8 + $0xa0] sm:$0xff]
    %v1053 = vld [vmem:[#allocation8 + $0xa8] sm:$0xff]
    %v1054 = vld [vmem:[#allocation8 + $0xb0] sm:$0xff]
    %v1055 = vld [vmem:[#allocation8 + $0xb8] sm:$0xff]
    %v1056 = vld [vmem:[#allocation8 + $0xc0] sm:$0xff]
    %v1057 = vld [vmem:[#allocation8 + $0xc8] sm:$0xff]
    %v1058 = vld [vmem:[#allocation8 + $0xd0] sm:$0xff]
    %v1059 = vld [vmem:[#allocation8 + $0xd8] sm:$0xff]
    %v1060 = vld [vmem:[#allocation8 + $0xe0] sm:$0xff]
    %v1061 = vld [vmem:[#allocation8 + $0xe8] sm:$0xff]
    %v1062 = vld [vmem:[#allocation8 + $0xf0] sm:$0xff]
    %v1063 = vld [vmem:[#allocation8 + $0xf8] sm:$0xff]
    %v1064 = vld [vmem:[#allocation9] sm:$0xff]
    %v1065 = vld [vmem:[#allocation9 + $0x8] sm:$0xff]
    %v1066 = vld [vmem:[#allocation9 + $0x10] sm:$0xff]
    %v1067 = vld [vmem:[#allocation9 + $0x18] sm:$0xff]
    %v1068 = vld [vmem:[#allocation9 + $0x20] sm:$0xff]
    %v1069 = vld [vmem:[#allocation9 + $0x28] sm:$0xff]
    %v1070 = vld [vmem:[#allocation9 + $0x30] sm:$0xff]
    %v1071 = vld [vmem:[#allocation9 + $0x38] sm:$0xff]
    %v1072 = vld [vmem:[#allocation9 + $0x40] sm:$0xff]
    %v1073 = vld [vmem:[#allocation9 + $0x48] sm:$0xff]
    %v1074 = vld [vmem:[#allocation9 + $0x50] sm:$0xff]
    %v1075 = vld [vmem:[#allocation9 + $0x58] sm:$0xff]
    %v1076 = vld [vmem:[#allocation9 + $0x60] sm:$0xff]
    %v1077 = vld [vmem:[#allocation9 + $0x68] sm:$0xff]
    %v1078 = vld [vmem:[#allocation9 + $0x70] sm:$0xff]
    %v1079 = vld [vmem:[#allocation9 + $0x78] sm:$0xff]
    %v1080 = vld [vmem:[#allocation9 + $0x80] sm:$0xff]
    %v1081 = vld [vmem:[#allocation9 + $0x88] sm:$0xff]
    %v1082 = vld [vmem:[#allocation9 + $0x90] sm:$0xff]
    %v1083 = vld [vmem:[#allocation9 + $0x98] sm:$0xff]
    %v1084 = vld [vmem:[#allocation9 + $0xa0] sm:$0xff]
    %v1085 = vld [vmem:[#allocation9 + $0xa8] sm:$0xff]
    %v1086 = vld [vmem:[#allocation9 + $0xb0] sm:$0xff]
    %v1087 = vld [vmem:[#allocation9 + $0xb8] sm:$0xff]
    %v1088 = vld [vmem:[#allocation9 + $0xc0] sm:$0xff]
    %v1089 = vld [vmem:[#allocation9 + $0xc8] sm:$0xff]
    %v1090 = vld [vmem:[#allocation9 + $0xd0] sm:$0xff]
    %v1091 = vld [vmem:[#allocation9 + $0xd8] sm:$0xff]
    %v1092 = vld [vmem:[#allocation9 + $0xe0] sm:$0xff]
    %v1093 = vld [vmem:[#allocation9 + $0xe8] sm:$0xff]
    %v1094 = vld [vmem:[#allocation9 + $0xf0] sm:$0xff]
    %v1095 = vld [vmem:[#allocation9 + $0xf8] sm:$0xff]
    %v1128 = vunpack.c.l.b16 %v1064
    %v1129 = vunpack.c.h.b16 %v1064
    %v1130 = vunpack.c.l.b16 %v1065
    %v1131 = vunpack.c.h.b16 %v1065
    %v1132 = vunpack.c.l.b16 %v1066
    %v1133 = vunpack.c.h.b16 %v1066
    %v1134 = vunpack.c.l.b16 %v1067
    %v1135 = vunpack.c.h.b16 %v1067
    %v1136 = vunpack.c.l.b16 %v1068
    %v1137 = vunpack.c.h.b16 %v1068
    %v1138 = vunpack.c.l.b16 %v1069
    %v1139 = vunpack.c.h.b16 %v1069
    %v1140 = vunpack.c.l.b16 %v1070
    %v1141 = vunpack.c.h.b16 %v1070
    %v1142 = vunpack.c.l.b16 %v1071
    %v1143 = vunpack.c.h.b16 %v1071
    %v1144 = vunpack.c.l.b16 %v1072
    %v1145 = vunpack.c.h.b16 %v1072
    %v1146 = vunpack.c.l.b16 %v1073
    %v1147 = vunpack.c.h.b16 %v1073
    %v1148 = vunpack.c.l.b16 %v1074
    %v1149 = vunpack.c.h.b16 %v1074
    %v1150 = vunpack.c.l.b16 %v1075
    %v1151 = vunpack.c.h.b16 %v1075
    %v1152 = vunpack.c.l.b16 %v1076
    %v1153 = vunpack.c.h.b16 %v1076
    %v1154 = vunpack.c.l.b16 %v1077
    %v1155 = vunpack.c.h.b16 %v1077
    %v1156 = vunpack.c.l.b16 %v1078
    %v1157 = vunpack.c.h.b16 %v1078
    %v1158 = vunpack.c.l.b16 %v1079
    %v1159 = vunpack.c.h.b16 %v1079
    %v1160 = vunpack.c.l.b16 %v1080
    %v1161 = vunpack.c.h.b16 %v1080
    %v1162 = vunpack.c.l.b16 %v1081
    %v1163 = vunpack.c.h.b16 %v1081
    %v1164 = vunpack.c.l.b16 %v1082
    %v1165 = vunpack.c.h.b16 %v1082
    %v1166 = vunpack.c.l.b16 %v1083
    %v1167 = vunpack.c.h.b16 %v1083
    %v1168 = vunpack.c.l.b16 %v1084
    %v1169 = vunpack.c.h.b16 %v1084
    %v1170 = vunpack.c.l.b16 %v1085
    %v1171 = vunpack.c.h.b16 %v1085
    %v1172 = vunpack.c.l.b16 %v1086
    %v1173 = vunpack.c.h.b16 %v1086
    %v1174 = vunpack.c.l.b16 %v1087
    %v1175 = vunpack.c.h.b16 %v1087
    %v1176 = vunpack.c.l.b16 %v1088
    %v1177 = vunpack.c.h.b16 %v1088
    %v1178 = vunpack.c.l.b16 %v1089
    %v1179 = vunpack.c.h.b16 %v1089
    %v1180 = vunpack.c.l.b16 %v1090
    %v1181 = vunpack.c.h.b16 %v1090
    %v1182 = vunpack.c.l.b16 %v1091
    %v1183 = vunpack.c.h.b16 %v1091
    %v1184 = vunpack.c.l.b16 %v1092
    %v1185 = vunpack.c.h.b16 %v1092
    %v1186 = vunpack.c.l.b16 %v1093
    %v1187 = vunpack.c.h.b16 %v1093
    %v1188 = vunpack.c.l.b16 %v1094
    %v1189 = vunpack.c.h.b16 %v1094
    %v1190 = vunpack.c.l.b16 %v1095
    %v1191 = vunpack.c.h.b16 %v1095
    %v1192 = vpack.c.b16 %v1130, %v1128
    %v1193 = vpack.c.b16 %v1131, %v1129
    %v1194 = vpack.c.b16 %v1134, %v1132
    %v1195 = vpack.c.b16 %v1135, %v1133
    %v1196 = vpack.c.b16 %v1138, %v1136
    %v1197 = vpack.c.b16 %v1139, %v1137
    %v1198 = vpack.c.b16 %v1142, %v1140
    %v1199 = vpack.c.b16 %v1143, %v1141
    %v1200 = vpack.c.b16 %v1146, %v1144
    %v1201 = vpack.c.b16 %v1147, %v1145
    %v1202 = vpack.c.b16 %v1150, %v1148
    %v1203 = vpack.c.b16 %v1151, %v1149
    %v1204 = vpack.c.b16 %v1154, %v1152
    %v1205 = vpack.c.b16 %v1155, %v1153
    %v1206 = vpack.c.b16 %v1158, %v1156
    %v1207 = vpack.c.b16 %v1159, %v1157
    %v1208 = vpack.c.b16 %v1162, %v1160
    %v1209 = vpack.c.b16 %v1163, %v1161
    %v1210 = vpack.c.b16 %v1166, %v1164
    %v1211 = vpack.c.b16 %v1167, %v1165
    %v1212 = vpack.c.b16 %v1170, %v1168
    %v1213 = vpack.c.b16 %v1171, %v1169
    %v1214 = vpack.c.b16 %v1174, %v1172
    %v1215 = vpack.c.b16 %v1175, %v1173
    %v1216 = vpack.c.b16 %v1178, %v1176
    %v1217 = vpack.c.b16 %v1179, %v1177
    %v1218 = vpack.c.b16 %v1182, %v1180
    %v1219 = vpack.c.b16 %v1183, %v1181
    %v1220 = vpack.c.b16 %v1186, %v1184
    %v1221 = vpack.c.b16 %v1187, %v1185
    %v1222 = vpack.c.b16 %v1190, %v1188
    %v1223 = vpack.c.b16 %v1191, %v1189
    %1256 = vmatprep.subr.bf16.mxu0 %v1193
    %1257 = vmatpush1.bf16.msra.mxu0 %v1192
    %1258 = vmatprep.subr.bf16.mxu0 %v1195
    %1259 = vmatpush1.bf16.msra.mxu0 %v1194
    %1260 = vmatprep.subr.bf16.mxu0 %v1197
    %1261 = vmatpush1.bf16.msra.mxu0 %v1196
    %1262 = vmatprep.subr.bf16.mxu0 %v1199
    %1263 = vmatpush1.bf16.msra.mxu0 %v1198
    %1264 = vmatprep.subr.bf16.mxu0 %v1201
    %1265 = vmatpush1.bf16.msra.mxu0 %v1200
    %1266 = vmatprep.subr.bf16.mxu0 %v1203
    %1267 = vmatpush1.bf16.msra.mxu0 %v1202
    %1268 = vmatprep.subr.bf16.mxu0 %v1205
    %1269 = vmatpush1.bf16.msra.mxu0 %v1204
    %1270 = vmatprep.subr.bf16.mxu0 %v1207
    %1271 = vmatpush1.bf16.msra.mxu0 %v1206
    %1272 = vmatprep.subr.bf16.mxu0 %v1209
    %1273 = vmatpush1.bf16.msra.mxu0 %v1208
    %1274 = vmatprep.subr.bf16.mxu0 %v1211
    %1275 = vmatpush1.bf16.msra.mxu0 %v1210
    %1276 = vmatprep.subr.bf16.mxu0 %v1213
    %1277 = vmatpush1.bf16.msra.mxu0 %v1212
    %1278 = vmatprep.subr.bf16.mxu0 %v1215
    %1279 = vmatpush1.bf16.msra.mxu0 %v1214
    %1280 = vmatprep.subr.bf16.mxu0 %v1217
    %1281 = vmatpush1.bf16.msra.mxu0 %v1216
    %1282 = vmatprep.subr.bf16.mxu0 %v1219
    %1283 = vmatpush1.bf16.msra.mxu0 %v1218
    %1284 = vmatprep.subr.bf16.mxu0 %v1221
    %1285 = vmatpush1.bf16.msra.mxu0 %v1220
    %1286 = vmatprep.subr.bf16.mxu0 %v1223
    %1287 = vmatpush1.bf16.msra.mxu0 %v1222
    %1288 = vmatprep.mubr.bf16.mxu0 %v736
    %1289 = vmatmul.mubr.bf16.gmra.mrb[0].mxu0 %v735
    %v1290 = vpop.f32.mrb[0].mxu0
    %v1291 = vadd.f32 0.0, %v1290
    %v1292 = vpop.f32.mrb[0].mxu0
    %v1293 = vadd.f32 0.0, %v1292
    %v1294 = vpop.f32.mrb[0].mxu0
    %v1295 = vadd.f32 0.0, %v1294
    %v1296 = vpop.f32.mrb[0].mxu0
    %v1297 = vadd.f32 0.0, %v1296
    %1298 = vmatprep.mubr.bf16.mxu0 %v738
    %1299 = vmatmul.mubr.bf16.gmra.mrb[0].mxu0 %v737
    %v1300 = vpop.f32.mrb[0].mxu0
    %v1301 = vadd.f32 0.0, %v1300
    %v1302 = vpop.f32.mrb[0].mxu0
    %v1303 = vadd.f32 0.0, %v1302
    %v1304 = vpop.f32.mrb[0].mxu0
    %v1305 = vadd.f32 0.0, %v1304
    %v1306 = vpop.f32.mrb[0].mxu0
    %v1307 = vadd.f32 0.0, %v1306
    %1308 = vmatprep.mubr.bf16.mxu0 %v740
    %1309 = vmatmul.mubr.bf16.gmra.mrb[0].mxu0 %v739
    %v1310 = vpop.f32.mrb[0].mxu0
    %v1311 = vadd.f32 0.0, %v1310
    %v1312 = vpop.f32.mrb[0].mxu0
    %v1313 = vadd.f32 0.0, %v1312
    %v1314 = vpop.f32.mrb[0].mxu0
    %v1315 = vadd.f32 0.0, %v1314
    %v1316 = vpop.f32.mrb[0].mxu0
    %v1317 = vadd.f32 0.0, %v1316
    %1318 = vmatprep.mubr.bf16.mxu0 %v742
    %1319 = vmatmul.mubr.bf16.gmra.mrb[0].mxu0 %v741
    %v1320 = vpop.f32.mrb[0].mxu0
    %v1321 = vadd.f32 0.0, %v1320
    %v1322 = vpop.f32.mrb[0].mxu0
    %v1323 = vadd.f32 0.0, %v1322
    %v1324 = vpop.f32.mrb[0].mxu0
    %v1325 = vpop.f32.mrb[0].mxu0
    %1326 = vdwg.mxu0
    %v1359 = vunpack.c.l.b16 %v1032
    %v1360 = vunpack.c.h.b16 %v1032
    %v1361 = vunpack.c.l.b16 %v1033
    %v1362 = vunpack.c.h.b16 %v1033
    %v1363 = vunpack.c.l.b16 %v1034
    %v1364 = vunpack.c.h.b16 %v1034
    %v1365 = vunpack.c.l.b16 %v1035
    %v1366 = vunpack.c.h.b16 %v1035
    %v1367 = vunpack.c.l.b16 %v1036
    %v1368 = vunpack.c.h.b16 %v1036
    %v1369 = vunpack.c.l.b16 %v1037
    %v1370 = vunpack.c.h.b16 %v1037
    %v1371 = vunpack.c.l.b16 %v1038
    %v1372 = vunpack.c.h.b16 %v1038
    %v1373 = vunpack.c.l.b16 %v1039
    %v1374 = vunpack.c.h.b16 %v1039
    %v1375 = vunpack.c.l.b16 %v1040
    %v1376 = vunpack.c.h.b16 %v1040
    %v1377 = vunpack.c.l.b16 %v1041
    %v1378 = vunpack.c.h.b16 %v1041
    %v1379 = vunpack.c.l.b16 %v1042
    %v1380 = vunpack.c.h.b16 %v1042
    %v1381 = vunpack.c.l.b16 %v1043
    %v1382 = vunpack.c.h.b16 %v1043
    %v1383 = vunpack.c.l.b16 %v1044
    %v1384 = vunpack.c.h.b16 %v1044
    %v1385 = vunpack.c.l.b16 %v1045
    %v1386 = vunpack.c.h.b16 %v1045
    %v1387 = vunpack.c.l.b16 %v1046
    %v1388 = vunpack.c.h.b16 %v1046
    %v1389 = vunpack.c.l.b16 %v1047
    %v1390 = vunpack.c.h.b16 %v1047
    %v1391 = vunpack.c.l.b16 %v1048
    %v1392 = vunpack.c.h.b16 %v1048
    %v1393 = vunpack.c.l.b16 %v1049
    %v1394 = vunpack.c.h.b16 %v1049
    %v1395 = vunpack.c.l.b16 %v1050
    %v1396 = vunpack.c.h.b16 %v1050
    %v1397 = vunpack.c.l.b16 %v1051
    %v1398 = vunpack.c.h.b16 %v1051
    %v1399 = vunpack.c.l.b16 %v1052
    %v1400 = vunpack.c.h.b16 %v1052
    %v1401 = vunpack.c.l.b16 %v1053
    %v1402 = vunpack.c.h.b16 %v1053
    %v1403 = vunpack.c.l.b16 %v1054
    %v1404 = vunpack.c.h.b16 %v1054
    %v1405 = vunpack.c.l.b16 %v1055
    %v1406 = vunpack.c.h.b16 %v1055
    %v1407 = vunpack.c.l.b16 %v1056
    %v1408 = vunpack.c.h.b16 %v1056
    %v1409 = vunpack.c.l.b16 %v1057
    %v1410 = vunpack.c.h.b16 %v1057
    %v1411 = vunpack.c.l.b16 %v1058
    %v1412 = vunpack.c.h.b16 %v1058
    %v1413 = vunpack.c.l.b16 %v1059
    %v1414 = vunpack.c.h.b16 %v1059
    %v1415 = vunpack.c.l.b16 %v1060
    %v1416 = vunpack.c.h.b16 %v1060
    %v1417 = vunpack.c.l.b16 %v1061
    %v1418 = vunpack.c.h.b16 %v1061
    %v1419 = vunpack.c.l.b16 %v1062
    %v1420 = vunpack.c.h.b16 %v1062
    %v1421 = vunpack.c.l.b16 %v1063
    %v1422 = vunpack.c.h.b16 %v1063
    %v1423 = vpack.c.b16 %v1361, %v1359
    %v1424 = vpack.c.b16 %v1362, %v1360
    %v1425 = vpack.c.b16 %v1365, %v1363
    %v1426 = vpack.c.b16 %v1366, %v1364
    %v1427 = vpack.c.b16 %v1369, %v1367
    %v1428 = vpack.c.b16 %v1370, %v1368
    %v1429 = vpack.c.b16 %v1373, %v1371
    %v1430 = vpack.c.b16 %v1374, %v1372
    %v1431 = vpack.c.b16 %v1377, %v1375
    %v1432 = vpack.c.b16 %v1378, %v1376
    %v1433 = vpack.c.b16 %v1381, %v1379
    %v1434 = vpack.c.b16 %v1382, %v1380
    %v1435 = vpack.c.b16 %v1385, %v1383
    %v1436 = vpack.c.b16 %v1386, %v1384
    %v1437 = vpack.c.b16 %v1389, %v1387
    %v1438 = vpack.c.b16 %v1390, %v1388
    %v1439 = vpack.c.b16 %v1393, %v1391
    %v1440 = vpack.c.b16 %v1394, %v1392
    %v1441 = vpack.c.b16 %v1397, %v1395
    %v1442 = vpack.c.b16 %v1398, %v1396
    %v1443 = vpack.c.b16 %v1401, %v1399
    %v1444 = vpack.c.b16 %v1402, %v1400
    %v1445 = vpack.c.b16 %v1405, %v1403
    %v1446 = vpack.c.b16 %v1406, %v1404
    %v1447 = vpack.c.b16 %v1409, %v1407
    %v1448 = vpack.c.b16 %v1410, %v1408
    %v1449 = vpack.c.b16 %v1413, %v1411
    %v1450 = vpack.c.b16 %v1414, %v1412
    %v1451 = vpack.c.b16 %v1417, %v1415
    %v1452 = vpack.c.b16 %v1418, %v1416
    %v1453 = vpack.c.b16 %v1421, %v1419
    %v1454 = vpack.c.b16 %v1422, %v1420
    %1487 = vmatprep.subr.bf16.mxu0 %v1424
    %1488 = vmatpush1.bf16.msra.mxu0 %v1423
    %1489 = vmatprep.subr.bf16.mxu0 %v1426
    %1490 = vmatpush1.bf16.msra.mxu0 %v1425
    %1491 = vmatprep.subr.bf16.mxu0 %v1428
    %1492 = vmatpush1.bf16.msra.mxu0 %v1427
    %1493 = vmatprep.subr.bf16.mxu0 %v1430
    %1494 = vmatpush1.bf16.msra.mxu0 %v1429
    %1495 = vmatprep.subr.bf16.mxu0 %v1432
    %1496 = vmatpush1.bf16.msra.mxu0 %v1431
    %1497 = vmatprep.subr.bf16.mxu0 %v1434
    %1498 = vmatpush1.bf16.msra.mxu0 %v1433
    %1499 = vmatprep.subr.bf16.mxu0 %v1436
    %1500 = vmatpush1.bf16.msra.mxu0 %v1435
    %1501 = vmatprep.subr.bf16.mxu0 %v1438
    %1502 = vmatpush1.bf16.msra.mxu0 %v1437
    %1503 = vmatprep.subr.bf16.mxu0 %v1440
    %1504 = vmatpush1.bf16.msra.mxu0 %v1439
    %1505 = vmatprep.subr.bf16.mxu0 %v1442
    %1506 = vmatpush1.bf16.msra.mxu0 %v1441
    %1507 = vmatprep.subr.bf16.mxu0 %v1444
    %1508 = vmatpush1.bf16.msra.mxu0 %v1443
    %1509 = vmatprep.subr.bf16.mxu0 %v1446
    %1510 = vmatpush1.bf16.msra.mxu0 %v1445
    %1511 = vmatprep.subr.bf16.mxu0 %v1448
    %1512 = vmatpush1.bf16.msra.mxu0 %v1447
    %1513 = vmatprep.subr.bf16.mxu0 %v1450
    %1514 = vmatpush1.bf16.msra.mxu0 %v1449
    %1515 = vmatprep.subr.bf16.mxu0 %v1452
    %1516 = vmatpush1.bf16.msra.mxu0 %v1451
    %1517 = vmatprep.subr.bf16.mxu0 %v1454
    %1518 = vmatpush1.bf16.msra.mxu0 %v1453
    %1519 = vmatprep.mubr.bf16.mxu0 %v714
    %1520 = vmatmul.mubr.bf16.gmra.mrb[0].mxu0 %v713
    %v1521 = vpop.f32.mrb[0].mxu0
    %v1522 = vadd.f32 %v1291, %v1521
    %v1523 = vpop.f32.mrb[0].mxu0
    %v1524 = vadd.f32 %v1293, %v1523
    %v1525 = vpop.f32.mrb[0].mxu0
    %v1526 = vadd.f32 %v1295, %v1525
    %v1527 = vpop.f32.mrb[0].mxu0
    %v1528 = vadd.f32 %v1297, %v1527
    %1529 = vmatprep.mubr.bf16.mxu0 %v716
    %1530 = vmatmul.mubr.bf16.gmra.mrb[0].mxu0 %v715
    %v1531 = vpop.f32.mrb[0].mxu0
    %v1532 = vadd.f32 %v1301, %v1531
    %v1533 = vpop.f32.mrb[0].mxu0
    %v1534 = vadd.f32 %v1303, %v1533
    %v1535 = vpop.f32.mrb[0].mxu0
    %v1536 = vadd.f32 %v1305, %v1535
    %v1537 = vpop.f32.mrb[0].mxu0
    %v1538 = vadd.f32 %v1307, %v1537
    %1539 = vmatprep.mubr.bf16.mxu0 %v718
    %1540 = vmatmul.mubr.bf16.gmra.mrb[0].mxu0 %v717
    %v1541 = vpop.f32.mrb[0].mxu0
    %v1542 = vadd.f32 %v1311, %v1541
    %v1543 = vpop.f32.mrb[0].mxu0
    %v1544 = vadd.f32 %v1313, %v1543
    %v1545 = vpop.f32.mrb[0].mxu0
    %v1546 = vadd.f32 %v1315, %v1545
    %v1547 = vpop.f32.mrb[0].mxu0
    %v1548 = vadd.f32 %v1317, %v1547
    %1549 = vmatprep.mubr.bf16.mxu0 %v720
    %1550 = vmatmul.mubr.bf16.gmra.mrb[0].mxu0 %v719
    %v1551 = vpop.f32.mrb[0].mxu0
    %v1552 = vadd.f32 %v1321, %v1551
    %v1553 = vpop.f32.mrb[0].mxu0
    %v1554 = vadd.f32 %v1323, %v1553
    %v1555 = vpop.f32.mrb[0].mxu0
    %v1556 = vpop.f32.mrb[0].mxu0
    %1557 = vdwg.mxu0
    %v1558 = vadd.f32 %v1522, %v780
    %v1559 = vadd.f32 %v1524, %v784
    %v1560 = vadd.f32 %v1526, %v780
    %v1561 = vadd.f32 %v1528, %v784
    %v1562 = vadd.f32 %v1532, %v780
    %v1563 = vadd.f32 %v1534, %v784
    %v1564 = vadd.f32 %v1536, %v780
    %v1565 = vadd.f32 %v1538, %v784
    %v1566 = vadd.f32 %v1542, %v780
    %v1567 = vadd.f32 %v1544, %v784
    %v1568 = vadd.f32 %v1546, %v780
    %v1569 = vadd.f32 %v1548, %v784
    %v1570 = vadd.f32 %v1552, %v780
    %v1571 = vadd.f32 %v1554, %v784
    %v1572 = vmax.f32 %v1558, 0.0
    %v1573 = vmax.f32 %v1559, 0.0
    %v1574 = vmax.f32 %v1560, 0.0
    %v1575 = vmax.f32 %v1561, 0.0
    %v1576 = vmax.f32 %v1562, 0.0
    %v1577 = vmax.f32 %v1563, 0.0
    %v1578 = vmax.f32 %v1564, 0.0
    %v1579 = vmax.f32 %v1565, 0.0
    %v1580 = vmax.f32 %v1566, 0.0
    %v1581 = vmax.f32 %v1567, 0.0
    %v1582 = vmax.f32 %v1568, 0.0
    %v1583 = vmax.f32 %v1569, 0.0
    %v1584 = vmax.f32 %v1570, 0.0
    %v1585 = vmax.f32 %v1571, 0.0
    %1586 = vst [vmem:[#allocation3 + $0x70] sm:$0xff] 0.0
    %1587 = vst [vmem:[#allocation3 + $0x78] sm:$0xff] 0.0
    %1588 = vst [vmem:[#allocation3] sm:$0xff] %v1018
    %1589 = vst [vmem:[#allocation3 + $0x8] sm:$0xff] %v1019
    %1590 = vst [vmem:[#allocation3 + $0x10] sm:$0xff] %v1020
    %1591 = vst [vmem:[#allocation3 + $0x18] sm:$0xff] %v1021
    %1592 = vst [vmem:[#allocation3 + $0x20] sm:$0xff] %v1022
    %1593 = vst [vmem:[#allocation3 + $0x28] sm:$0xff] %v1023
    %1594 = vst [vmem:[#allocation3 + $0x30] sm:$0xff] %v1024
    %1595 = vst [vmem:[#allocation3 + $0x38] sm:$0xff] %v1025
    %1596 = vst [vmem:[#allocation3 + $0x40] sm:$0xff] %v1026
    %1597 = vst [vmem:[#allocation3 + $0x48] sm:$0xff] %v1027
    %1598 = vst [vmem:[#allocation3 + $0x50] sm:$0xff] %v1028
    %1599 = vst [vmem:[#allocation3 + $0x58] sm:$0xff] %v1029
    %1600 = vst [vmem:[#allocation3 + $0x60] sm:$0xff] %v1030
    %1601 = vst [vmem:[#allocation3 + $0x68] sm:$0xff] %v1031
    %v1602 = vld [vmem:[#allocation3 + $0x10] sm:$0xff]
    %v1603 = vld [vmem:[#allocation3 + $0x18] sm:$0xff]
    %v1604 = vld [vmem:[#allocation3 + $0x20] sm:$0xff]
    %v1605 = vld [vmem:[#allocation3 + $0x28] sm:$0xff]
    %v1606 = vld [vmem:[#allocation3 + $0x30] sm:$0xff]
    %v1607 = vld [vmem:[#allocation3 + $0x38] sm:$0xff]
    %v1608 = vld [vmem:[#allocation3 + $0x40] sm:$0xff]
    %v1609 = vld [vmem:[#allocation3 + $0x48] sm:$0xff]
    %v1610 = vld [vmem:[#allocation3 + $0x50] sm:$0xff]
    %v1611 = vld [vmem:[#allocation3 + $0x58] sm:$0xff]
    %v1612 = vld [vmem:[#allocation3 + $0x60] sm:$0xff]
    %v1613 = vld [vmem:[#allocation3 + $0x68] sm:$0xff]
    %v1614 = vld [vmem:[#allocation3 + $0x70] sm:$0xff]
    %v1615 = vld [vmem:[#allocation3 + $0x78] sm:$0xff]
    %v1616 = vpack.c.bf16 %v1604, %v1602
    %v1617 = vpack.c.bf16 %v1605, %v1603
    %v1618 = vpack.c.bf16 %v1608, %v1606
    %v1619 = vpack.c.bf16 %v1609, %v1607
    %v1620 = vpack.c.bf16 %v1612, %v1610
    %v1621 = vpack.c.bf16 %v1613, %v1611
    %v1622 = vpack.c.bf16 %v1614, %v1614
    %v1623 = vpack.c.bf16 %v1615, %v1615
    %v1624 = vpack.c.bf16 %v1020, %v1018
    %v1625 = vpack.c.bf16 %v1021, %v1019
    %v1626 = vpack.c.bf16 %v1024, %v1022
    %v1627 = vpack.c.bf16 %v1025, %v1023
    %v1628 = vpack.c.bf16 %v1028, %v1026
    %v1629 = vpack.c.bf16 %v1029, %v1027
    %v1630 = vpack.c.bf16 %v1030, %v1030
    %v1631 = vpack.c.bf16 %v1031, %v1031
    %v1632 = vld [vmem:[#allocation11] sm:$0xf]
    %v1633 = vld [vmem:[#allocation11 + $0x4] sm:$0xf]
    %v1634 = vld [vmem:[#allocation11 + $0x8] sm:$0xf]
    %v1635 = vld [vmem:[#allocation11 + $0xc] sm:$0xf]
    %v1636 = vld [vmem:[#allocation11 + $0x10] sm:$0xf]
    %v1637 = vld [vmem:[#allocation11 + $0x14] sm:$0xf]
    %v1638 = vld [vmem:[#allocation11 + $0x18] sm:$0xf]
    %v1639 = vld [vmem:[#allocation11 + $0x1c] sm:$0xf]
    %v1640 = vld [vmem:[#allocation11 + $0x20] sm:$0xf]
    %v1641 = vld [vmem:[#allocation11 + $0x24] sm:$0xf]
    %v1642 = vld [vmem:[#allocation11 + $0x28] sm:$0xf]
    %v1643 = vld [vmem:[#allocation11 + $0x2c] sm:$0xf]
    %v1644 = vld [vmem:[#allocation11 + $0x30] sm:$0xf]
    %v1645 = vld [vmem:[#allocation11 + $0x34] sm:$0xf]
    %v1646 = vld [vmem:[#allocation11 + $0x38] sm:$0xf]
    %v1647 = vld [vmem:[#allocation11 + $0x3c] sm:$0xf]
    %v1648 = vld [vmem:[#allocation11 + $0x40] sm:$0xf]
    %v1649 = vld [vmem:[#allocation11 + $0x44] sm:$0xf]
    %v1650 = vld [vmem:[#allocation11 + $0x48] sm:$0xf]
    %v1651 = vld [vmem:[#allocation11 + $0x4c] sm:$0xf]
    %v1652 = vld [vmem:[#allocation11 + $0x50] sm:$0xf]
    %v1653 = vld [vmem:[#allocation11 + $0x54] sm:$0xf]
    %v1654 = vld [vmem:[#allocation11 + $0x58] sm:$0xf]
    %v1655 = vld [vmem:[#allocation11 + $0x5c] sm:$0xf]
    %v1656 = vld [vmem:[#allocation11 + $0x60] sm:$0xf]
    %v1657 = vld [vmem:[#allocation11 + $0x64] sm:$0xf]
    %v1658 = vld [vmem:[#allocation11 + $0x68] sm:$0xf]
    %v1659 = vld [vmem:[#allocation11 + $0x6c] sm:$0xf]
    %v1660 = vld [vmem:[#allocation11 + $0x70] sm:$0xf]
    %v1661 = vld [vmem:[#allocation11 + $0x74] sm:$0xf]
    %v1662 = vld [vmem:[#allocation11 + $0x78] sm:$0xf]
    %v1663 = vld [vmem:[#allocation11 + $0x7c] sm:$0xf]
    %v1664 = vpack.c.bf16 %v1574, %v1572
    %v1665 = vpack.c.bf16 %v1575, %v1573
    %v1666 = vpack.c.bf16 %v1578, %v1576
    %v1667 = vpack.c.bf16 %v1579, %v1577
    %v1668 = vpack.c.bf16 %v1582, %v1580
    %v1669 = vpack.c.bf16 %v1583, %v1581
    %v1670 = vpack.c.bf16 %v1584, %v1584
    %v1671 = vpack.c.bf16 %v1585, %v1585
    %v1672 = vld [vmem:[#allocation12] sm:$0xf]
    %v1673 = vld [vmem:[#allocation12 + $0x4] sm:$0xf]
    %v1674 = vld [vmem:[#allocation12 + $0x8] sm:$0xf]
    %v1675 = vld [vmem:[#allocation12 + $0xc] sm:$0xf]
    %v1676 = vld [vmem:[#allocation12 + $0x10] sm:$0xf]
    %v1677 = vld [vmem:[#allocation12 + $0x14] sm:$0xf]
    %v1678 = vld [vmem:[#allocation12 + $0x18] sm:$0xf]
    %v1679 = vld [vmem:[#allocation12 + $0x1c] sm:$0xf]
    %v1680 = vld [vmem:[#allocation12 + $0x20] sm:$0xf]
    %v1681 = vld [vmem:[#allocation12 + $0x24] sm:$0xf]
    %v1682 = vld [vmem:[#allocation12 + $0x28] sm:$0xf]
    %v1683 = vld [vmem:[#allocation12 + $0x2c] sm:$0xf]
    %v1684 = vld [vmem:[#allocation12 + $0x30] sm:$0xf]
    %v1685 = vld [vmem:[#allocation12 + $0x34] sm:$0xf]
    %v1686 = vld [vmem:[#allocation12 + $0x38] sm:$0xf]
    %v1687 = vld [vmem:[#allocation12 + $0x3c] sm:$0xf]
    %v1688 = vld [vmem:[#allocation12 + $0x40] sm:$0xf]
    %v1689 = vld [vmem:[#allocation12 + $0x44] sm:$0xf]
    %v1690 = vld [vmem:[#allocation12 + $0x48] sm:$0xf]
    %v1691 = vld [vmem:[#allocation12 + $0x4c] sm:$0xf]
    %v1692 = vld [vmem:[#allocation12 + $0x50] sm:$0xf]
    %v1693 = vld [vmem:[#allocation12 + $0x54] sm:$0xf]
    %v1694 = vld [vmem:[#allocation12 + $0x58] sm:$0xf]
    %v1695 = vld [vmem:[#allocation12 + $0x5c] sm:$0xf]
    %v1696 = vld [vmem:[#allocation12 + $0x60] sm:$0xf]
    %v1697 = vld [vmem:[#allocation12 + $0x64] sm:$0xf]
    %v1698 = vld [vmem:[#allocation12 + $0x68] sm:$0xf]
    %v1699 = vld [vmem:[#allocation12 + $0x6c] sm:$0xf]
    %v1700 = vld [vmem:[#allocation12 + $0x70] sm:$0xf]
    %v1701 = vld [vmem:[#allocation12 + $0x74] sm:$0xf]
    %v1702 = vld [vmem:[#allocation12 + $0x78] sm:$0xf]
    %v1703 = vld [vmem:[#allocation12 + $0x7c] sm:$0xf]
    %v1736 = vunpack.c.l.b16 %v1672
    %v1737 = vunpack.c.l.b16 %v1673
    %v1738 = vunpack.c.l.b16 %v1674
    %v1739 = vunpack.c.l.b16 %v1675
    %v1740 = vunpack.c.l.b16 %v1676
    %v1741 = vunpack.c.l.b16 %v1677
    %v1742 = vunpack.c.l.b16 %v1678
    %v1743 = vunpack.c.l.b16 %v1679
    %v1744 = vunpack.c.l.b16 %v1680
    %v1745 = vunpack.c.l.b16 %v1681
    %v1746 = vunpack.c.l.b16 %v1682
    %v1747 = vunpack.c.l.b16 %v1683
    %v1748 = vunpack.c.l.b16 %v1684
    %v1749 = vunpack.c.l.b16 %v1685
    %v1750 = vunpack.c.l.b16 %v1686
    %v1751 = vunpack.c.l.b16 %v1687
    %v1752 = vunpack.c.l.b16 %v1688
    %v1753 = vunpack.c.l.b16 %v1689
    %v1754 = vunpack.c.l.b16 %v1690
    %v1755 = vunpack.c.l.b16 %v1691
    %v1756 = vunpack.c.l.b16 %v1692
    %v1757 = vunpack.c.l.b16 %v1693
    %v1758 = vunpack.c.l.b16 %v1694
    %v1759 = vunpack.c.l.b16 %v1695
    %v1760 = vunpack.c.l.b16 %v1696
    %v1761 = vunpack.c.l.b16 %v1697
    %v1762 = vunpack.c.l.b16 %v1698
    %v1763 = vunpack.c.l.b16 %v1699
    %v1764 = vunpack.c.l.b16 %v1700
    %v1765 = vunpack.c.l.b16 %v1701
    %v1766 = vunpack.c.l.b16 %v1702
    %v1767 = vunpack.c.l.b16 %v1703
    %v1768 = vpack.c.b16 %v1737, %v1736
    %v1769 = vpack.c.b16 %v1739, %v1738
    %v1770 = vpack.c.b16 %v1741, %v1740
    %v1771 = vpack.c.b16 %v1743, %v1742
    %v1772 = vpack.c.b16 %v1745, %v1744
    %v1773 = vpack.c.b16 %v1747, %v1746
    %v1774 = vpack.c.b16 %v1749, %v1748
    %v1775 = vpack.c.b16 %v1751, %v1750
    %v1776 = vpack.c.b16 %v1753, %v1752
    %v1777 = vpack.c.b16 %v1755, %v1754
    %v1778 = vpack.c.b16 %v1757, %v1756
    %v1779 = vpack.c.b16 %v1759, %v1758
    %v1780 = vpack.c.b16 %v1761, %v1760
    %v1781 = vpack.c.b16 %v1763, %v1762
    %v1782 = vpack.c.b16 %v1765, %v1764
    %v1783 = vpack.c.b16 %v1767, %v1766
    %1800 = vmatprep.subr.bf16.mxu0 0
    %1801 = vmatpush1.bf16.msra.mxu0 %v1768
    %1802 = vmatprep.subr.bf16.mxu0 0
    %1803 = vmatpush1.bf16.msra.mxu0 %v1769
    %1804 = vmatprep.subr.bf16.mxu0 0
    %1805 = vmatpush1.bf16.msra.mxu0 %v1770
    %1806 = vmatprep.subr.bf16.mxu0 0
    %1807 = vmatpush1.bf16.msra.mxu0 %v1771
    %1808 = vmatprep.subr.bf16.mxu0 0
    %1809 = vmatpush1.bf16.msra.mxu0 %v1772
    %1810 = vmatprep.subr.bf16.mxu0 0
    %1811 = vmatpush1.bf16.msra.mxu0 %v1773
    %1812 = vmatprep.subr.bf16.mxu0 0
    %1813 = vmatpush1.bf16.msra.mxu0 %v1774
    %1814 = vmatprep.subr.bf16.mxu0 0
    %1815 = vmatpush1.bf16.msra.mxu0 %v1775
    %1816 = vmatprep.subr.bf16.mxu0 0
    %1817 = vmatpush1.bf16.msra.mxu0 %v1776
    %1818 = vmatprep.subr.bf16.mxu0 0
    %1819 = vmatpush1.bf16.msra.mxu0 %v1777
    %1820 = vmatprep.subr.bf16.mxu0 0
    %1821 = vmatpush1.bf16.msra.mxu0 %v1778
    %1822 = vmatprep.subr.bf16.mxu0 0
    %1823 = vmatpush1.bf16.msra.mxu0 %v1779
    %1824 = vmatprep.subr.bf16.mxu0 0
    %1825 = vmatpush1.bf16.msra.mxu0 %v1780
    %1826 = vmatprep.subr.bf16.mxu0 0
    %1827 = vmatpush1.bf16.msra.mxu0 %v1781
    %1828 = vmatprep.subr.bf16.mxu0 0
    %1829 = vmatpush1.bf16.msra.mxu0 %v1782
    %1830 = vmatprep.subr.bf16.mxu0 0
    %1831 = vmatpush1.bf16.msra.mxu0 %v1783
    %1832 = vmatprep.mubr.bf16.mxu0 %v1665
    %1833 = vmatmul.mubr.bf16.gmra.mrb[0].mxu0 %v1664
    %v1834 = vpop.f32.mrb[0].mxu0
    %v1835 = vadd.f32 0.0, %v1834
    %v1836 = vpop.f32.mrb[0].mxu0
    %v1837 = vpop.f32.mrb[0].mxu0
    %v1838 = vadd.f32 0.0, %v1837
    %v1839 = vpop.f32.mrb[0].mxu0
    %1840 = vmatprep.mubr.bf16.mxu0 %v1667
    %1841 = vmatmul.mubr.bf16.gmra.mrb[0].mxu0 %v1666
    %v1842 = vpop.f32.mrb[0].mxu0
    %v1843 = vadd.f32 0.0, %v1842
    %v1844 = vpop.f32.mrb[0].mxu0
    %v1845 = vpop.f32.mrb[0].mxu0
    %v1846 = vadd.f32 0.0, %v1845
    %v1847 = vpop.f32.mrb[0].mxu0
    %1848 = vmatprep.mubr.bf16.mxu0 %v1669
    %1849 = vmatmul.mubr.bf16.gmra.mrb[0].mxu0 %v1668
    %v1850 = vpop.f32.mrb[0].mxu0
    %v1851 = vadd.f32 0.0, %v1850
    %v1852 = vpop.f32.mrb[0].mxu0
    %v1853 = vpop.f32.mrb[0].mxu0
    %v1854 = vadd.f32 0.0, %v1853
    %v1855 = vpop.f32.mrb[0].mxu0
    %1856 = vmatprep.mubr.bf16.mxu0 %v1671
    %1857 = vmatmul.mubr.bf16.gmra.mrb[0].mxu0 %v1670
    %v1858 = vpop.f32.mrb[0].mxu0
    %v1859 = vadd.f32 0.0, %v1858
    %v1860 = vpop.f32.mrb[0].mxu0
    %v1861 = vpop.f32.mrb[0].mxu0
    %v1862 = vpop.f32.mrb[0].mxu0
    %1863 = vdwg.mxu0
    %v1896 = vunpack.c.l.b16 %v1632
    %v1897 = vunpack.c.l.b16 %v1633
    %v1898 = vunpack.c.l.b16 %v1634
    %v1899 = vunpack.c.l.b16 %v1635
    %v1900 = vunpack.c.l.b16 %v1636
    %v1901 = vunpack.c.l.b16 %v1637
    %v1902 = vunpack.c.l.b16 %v1638
    %v1903 = vunpack.c.l.b16 %v1639
    %v1904 = vunpack.c.l.b16 %v1640
    %v1905 = vunpack.c.l.b16 %v1641
    %v1906 = vunpack.c.l.b16 %v1642
    %v1907 = vunpack.c.l.b16 %v1643
    %v1908 = vunpack.c.l.b16 %v1644
    %v1909 = vunpack.c.l.b16 %v1645
    %v1910 = vunpack.c.l.b16 %v1646
    %v1911 = vunpack.c.l.b16 %v1647
    %v1912 = vunpack.c.l.b16 %v1648
    %v1913 = vunpack.c.l.b16 %v1649
    %v1914 = vunpack.c.l.b16 %v1650
    %v1915 = vunpack.c.l.b16 %v1651
    %v1916 = vunpack.c.l.b16 %v1652
    %v1917 = vunpack.c.l.b16 %v1653
    %v1918 = vunpack.c.l.b16 %v1654
    %v1919 = vunpack.c.l.b16 %v1655
    %v1920 = vunpack.c.l.b16 %v1656
    %v1921 = vunpack.c.l.b16 %v1657
    %v1922 = vunpack.c.l.b16 %v1658
    %v1923 = vunpack.c.l.b16 %v1659
    %v1924 = vunpack.c.l.b16 %v1660
    %v1925 = vunpack.c.l.b16 %v1661
    %v1926 = vunpack.c.l.b16 %v1662
    %v1927 = vunpack.c.l.b16 %v1663
    %v1928 = vpack.c.b16 %v1897, %v1896
    %v1929 = vpack.c.b16 %v1899, %v1898
    %v1930 = vpack.c.b16 %v1901, %v1900
    %v1931 = vpack.c.b16 %v1903, %v1902
    %v1932 = vpack.c.b16 %v1905, %v1904
    %v1933 = vpack.c.b16 %v1907, %v1906
    %v1934 = vpack.c.b16 %v1909, %v1908
    %v1935 = vpack.c.b16 %v1911, %v1910
    %v1936 = vpack.c.b16 %v1913, %v1912
    %v1937 = vpack.c.b16 %v1915, %v1914
    %v1938 = vpack.c.b16 %v1917, %v1916
    %v1939 = vpack.c.b16 %v1919, %v1918
    %v1940 = vpack.c.b16 %v1921, %v1920
    %v1941 = vpack.c.b16 %v1923, %v1922
    %v1942 = vpack.c.b16 %v1925, %v1924
    %v1943 = vpack.c.b16 %v1927, %v1926
    %1960 = vmatprep.subr.bf16.mxu0 0
    %1961 = vmatpush1.bf16.msra.mxu0 %v1928
    %1962 = vmatprep.subr.bf16.mxu0 0
    %1963 = vmatpush1.bf16.msra.mxu0 %v1929
    %1964 = vmatprep.subr.bf16.mxu0 0
    %1965 = vmatpush1.bf16.msra.mxu0 %v1930
    %1966 = vmatprep.subr.bf16.mxu0 0
    %1967 = vmatpush1.bf16.msra.mxu0 %v1931
    %1968 = vmatprep.subr.bf16.mxu0 0
    %1969 = vmatpush1.bf16.msra.mxu0 %v1932
    %1970 = vmatprep.subr.bf16.mxu0 0
    %1971 = vmatpush1.bf16.msra.mxu0 %v1933
    %1972 = vmatprep.subr.bf16.mxu0 0
    %1973 = vmatpush1.bf16.msra.mxu0 %v1934
    %1974 = vmatprep.subr.bf16.mxu0 0
    %1975 = vmatpush1.bf16.msra.mxu0 %v1935
    %1976 = vmatprep.subr.bf16.mxu0 0
    %1977 = vmatpush1.bf16.msra.mxu0 %v1936
    %1978 = vmatprep.subr.bf16.mxu0 0
    %1979 = vmatpush1.bf16.msra.mxu0 %v1937
    %1980 = vmatprep.subr.bf16.mxu0 0
    %1981 = vmatpush1.bf16.msra.mxu0 %v1938
    %1982 = vmatprep.subr.bf16.mxu0 0
    %1983 = vmatpush1.bf16.msra.mxu0 %v1939
    %1984 = vmatprep.subr.bf16.mxu0 0
    %1985 = vmatpush1.bf16.msra.mxu0 %v1940
    %1986 = vmatprep.subr.bf16.mxu0 0
    %1987 = vmatpush1.bf16.msra.mxu0 %v1941
    %1988 = vmatprep.subr.bf16.mxu0 0
    %1989 = vmatpush1.bf16.msra.mxu0 %v1942
    %1990 = vmatprep.subr.bf16.mxu0 0
    %1991 = vmatpush1.bf16.msra.mxu0 %v1943
    %1992 = vmatprep.mubr.bf16.mxu0 %v1625
    %1993 = vmatmul.mubr.bf16.gmra.mrb[0].mxu0 %v1624
    %v1994 = vpop.f32.mrb[0].mxu0
    %v1995 = vadd.f32 %v1835, %v1994
    %v1996 = vpop.f32.mrb[0].mxu0
    %v1997 = vpop.f32.mrb[0].mxu0
    %v1998 = vadd.f32 %v1838, %v1997
    %v1999 = vpop.f32.mrb[0].mxu0
    %2000 = vmatprep.mubr.bf16.mxu0 %v1627
    %2001 = vmatmul.mubr.bf16.gmra.mrb[0].mxu0 %v1626
    %v2002 = vpop.f32.mrb[0].mxu0
    %v2003 = vadd.f32 %v1843, %v2002
    %v2004 = vpop.f32.mrb[0].mxu0
    %v2005 = vpop.f32.mrb[0].mxu0
    %v2006 = vadd.f32 %v1846, %v2005
    %v2007 = vpop.f32.mrb[0].mxu0
    %2008 = vmatprep.mubr.bf16.mxu0 %v1629
    %2009 = vmatmul.mubr.bf16.gmra.mrb[0].mxu0 %v1628
    %v2010 = vpop.f32.mrb[0].mxu0
    %v2011 = vadd.f32 %v1851, %v2010
    %v2012 = vpop.f32.mrb[0].mxu0
    %v2013 = vpop.f32.mrb[0].mxu0
    %v2014 = vadd.f32 %v1854, %v2013
    %v2015 = vpop.f32.mrb[0].mxu0
    %2016 = vmatprep.mubr.bf16.mxu0 %v1631
    %2017 = vmatmul.mubr.bf16.gmra.mrb[0].mxu0 %v1630
    %v2018 = vpop.f32.mrb[0].mxu0
    %v2019 = vadd.f32 %v1859, %v2018
    %v2020 = vpop.f32.mrb[0].mxu0
    %v2021 = vpop.f32.mrb[0].mxu0
    %v2022 = vpop.f32.mrb[0].mxu0
    %2023 = vdwg.mxu0
    %v2024 = vld [vmem:[#allocation14] sm:$0xf]
    %v2025 = vld [vmem:[#allocation14 + $0x4] sm:$0xf]
    %v2026 = vld [vmem:[#allocation14 + $0x8] sm:$0xf]
    %v2027 = vld [vmem:[#allocation14 + $0xc] sm:$0xf]
    %v2028 = vld [vmem:[#allocation14 + $0x10] sm:$0xf]
    %v2029 = vld [vmem:[#allocation14 + $0x14] sm:$0xf]
    %v2030 = vld [vmem:[#allocation14 + $0x18] sm:$0xf]
    %v2031 = vld [vmem:[#allocation14 + $0x1c] sm:$0xf]
    %v2032 = vld [vmem:[#allocation14 + $0x20] sm:$0xf]
    %v2033 = vld [vmem:[#allocation14 + $0x24] sm:$0xf]
    %v2034 = vld [vmem:[#allocation14 + $0x28] sm:$0xf]
    %v2035 = vld [vmem:[#allocation14 + $0x2c] sm:$0xf]
    %v2036 = vld [vmem:[#allocation14 + $0x30] sm:$0xf]
    %v2037 = vld [vmem:[#allocation14 + $0x34] sm:$0xf]
    %v2038 = vld [vmem:[#allocation14 + $0x38] sm:$0xf]
    %v2039 = vld [vmem:[#allocation14 + $0x3c] sm:$0xf]
    %v2040 = vld [vmem:[#allocation14 + $0x40] sm:$0xf]
    %v2041 = vld [vmem:[#allocation14 + $0x44] sm:$0xf]
    %v2042 = vld [vmem:[#allocation14 + $0x48] sm:$0xf]
    %v2043 = vld [vmem:[#allocation14 + $0x4c] sm:$0xf]
    %v2044 = vld [vmem:[#allocation14 + $0x50] sm:$0xf]
    %v2045 = vld [vmem:[#allocation14 + $0x54] sm:$0xf]
    %v2046 = vld [vmem:[#allocation14 + $0x58] sm:$0xf]
    %v2047 = vld [vmem:[#allocation14 + $0x5c] sm:$0xf]
    %v2048 = vld [vmem:[#allocation14 + $0x60] sm:$0xf]
    %v2049 = vld [vmem:[#allocation14 + $0x64] sm:$0xf]
    %v2050 = vld [vmem:[#allocation14 + $0x68] sm:$0xf]
    %v2051 = vld [vmem:[#allocation14 + $0x6c] sm:$0xf]
    %v2052 = vld [vmem:[#allocation14 + $0x70] sm:$0xf]
    %v2053 = vld [vmem:[#allocation14 + $0x74] sm:$0xf]
    %v2054 = vld [vmem:[#allocation14 + $0x78] sm:$0xf]
    %v2055 = vld [vmem:[#allocation14 + $0x7c] sm:$0xf]
    %v2088 = vunpack.c.l.b16 %v2024
    %v2089 = vunpack.c.l.b16 %v2025
    %v2090 = vunpack.c.l.b16 %v2026
    %v2091 = vunpack.c.l.b16 %v2027
    %v2092 = vunpack.c.l.b16 %v2028
    %v2093 = vunpack.c.l.b16 %v2029
    %v2094 = vunpack.c.l.b16 %v2030
    %v2095 = vunpack.c.l.b16 %v2031
    %v2096 = vunpack.c.l.b16 %v2032
    %v2097 = vunpack.c.l.b16 %v2033
    %v2098 = vunpack.c.l.b16 %v2034
    %v2099 = vunpack.c.l.b16 %v2035
    %v2100 = vunpack.c.l.b16 %v2036
    %v2101 = vunpack.c.l.b16 %v2037
    %v2102 = vunpack.c.l.b16 %v2038
    %v2103 = vunpack.c.l.b16 %v2039
    %v2104 = vunpack.c.l.b16 %v2040
    %v2105 = vunpack.c.l.b16 %v2041
    %v2106 = vunpack.c.l.b16 %v2042
    %v2107 = vunpack.c.l.b16 %v2043
    %v2108 = vunpack.c.l.b16 %v2044
    %v2109 = vunpack.c.l.b16 %v2045
    %v2110 = vunpack.c.l.b16 %v2046
    %v2111 = vunpack.c.l.b16 %v2047
    %v2112 = vunpack.c.l.b16 %v2048
    %v2113 = vunpack.c.l.b16 %v2049
    %v2114 = vunpack.c.l.b16 %v2050
    %v2115 = vunpack.c.l.b16 %v2051
    %v2116 = vunpack.c.l.b16 %v2052
    %v2117 = vunpack.c.l.b16 %v2053
    %v2118 = vunpack.c.l.b16 %v2054
    %v2119 = vunpack.c.l.b16 %v2055
    %v2120 = vpack.c.b16 %v2089, %v2088
    %v2121 = vpack.c.b16 %v2091, %v2090
    %v2122 = vpack.c.b16 %v2093, %v2092
    %v2123 = vpack.c.b16 %v2095, %v2094
    %v2124 = vpack.c.b16 %v2097, %v2096
    %v2125 = vpack.c.b16 %v2099, %v2098
    %v2126 = vpack.c.b16 %v2101, %v2100
    %v2127 = vpack.c.b16 %v2103, %v2102
    %v2128 = vpack.c.b16 %v2105, %v2104
    %v2129 = vpack.c.b16 %v2107, %v2106
    %v2130 = vpack.c.b16 %v2109, %v2108
    %v2131 = vpack.c.b16 %v2111, %v2110
    %v2132 = vpack.c.b16 %v2113, %v2112
    %v2133 = vpack.c.b16 %v2115, %v2114
    %v2134 = vpack.c.b16 %v2117, %v2116
    %v2135 = vpack.c.b16 %v2119, %v2118
    %2152 = vmatprep.subr.bf16.mxu0 0
    %2153 = vmatpush1.bf16.msra.mxu0 %v2120
    %2154 = vmatprep.subr.bf16.mxu0 0
    %2155 = vmatpush1.bf16.msra.mxu0 %v2121
    %2156 = vmatprep.subr.bf16.mxu0 0
    %2157 = vmatpush1.bf16.msra.mxu0 %v2122
    %2158 = vmatprep.subr.bf16.mxu0 0
    %2159 = vmatpush1.bf16.msra.mxu0 %v2123
    %2160 = vmatprep.subr.bf16.mxu0 0
    %2161 = vmatpush1.bf16.msra.mxu0 %v2124
    %2162 = vmatprep.subr.bf16.mxu0 0
    %2163 = vmatpush1.bf16.msra.mxu0 %v2125
    %2164 = vmatprep.subr.bf16.mxu0 0
    %2165 = vmatpush1.bf16.msra.mxu0 %v2126
    %2166 = vmatprep.subr.bf16.mxu0 0
    %2167 = vmatpush1.bf16.msra.mxu0 %v2127
    %2168 = vmatprep.subr.bf16.mxu0 0
    %2169 = vmatpush1.bf16.msra.mxu0 %v2128
    %2170 = vmatprep.subr.bf16.mxu0 0
    %2171 = vmatpush1.bf16.msra.mxu0 %v2129
    %2172 = vmatprep.subr.bf16.mxu0 0
    %2173 = vmatpush1.bf16.msra.mxu0 %v2130
    %2174 = vmatprep.subr.bf16.mxu0 0
    %2175 = vmatpush1.bf16.msra.mxu0 %v2131
    %2176 = vmatprep.subr.bf16.mxu0 0
    %2177 = vmatpush1.bf16.msra.mxu0 %v2132
    %2178 = vmatprep.subr.bf16.mxu0 0
    %2179 = vmatpush1.bf16.msra.mxu0 %v2133
    %2180 = vmatprep.subr.bf16.mxu0 0
    %2181 = vmatpush1.bf16.msra.mxu0 %v2134
    %2182 = vmatprep.subr.bf16.mxu0 0
    %2183 = vmatpush1.bf16.msra.mxu0 %v2135
    %2184 = vmatprep.mubr.bf16.mxu0 %v1617
    %2185 = vmatmul.mubr.bf16.gmra.mrb[0].mxu0 %v1616
    %v2186 = vpop.f32.mrb[0].mxu0
    %v2187 = vadd.f32 0.0, %v2186
    %v2188 = vpop.f32.mrb[0].mxu0
    %v2189 = vpop.f32.mrb[0].mxu0
    %v2190 = vadd.f32 0.0, %v2189
    %v2191 = vpop.f32.mrb[0].mxu0
    %2192 = vmatprep.mubr.bf16.mxu0 %v1619
    %2193 = vmatmul.mubr.bf16.gmra.mrb[0].mxu0 %v1618
    %v2194 = vpop.f32.mrb[0].mxu0
    %v2195 = vadd.f32 0.0, %v2194
    %v2196 = vpop.f32.mrb[0].mxu0
    %v2197 = vpop.f32.mrb[0].mxu0
    %v2198 = vadd.f32 0.0, %v2197
    %v2199 = vpop.f32.mrb[0].mxu0
    %2200 = vmatprep.mubr.bf16.mxu0 %v1621
    %2201 = vmatmul.mubr.bf16.gmra.mrb[0].mxu0 %v1620
    %v2202 = vpop.f32.mrb[0].mxu0
    %v2203 = vadd.f32 0.0, %v2202
    %v2204 = vpop.f32.mrb[0].mxu0
    %v2205 = vpop.f32.mrb[0].mxu0
    %v2206 = vadd.f32 0.0, %v2205
    %v2207 = vpop.f32.mrb[0].mxu0
    %2208 = vmatprep.mubr.bf16.mxu0 %v1623
    %2209 = vmatmul.mubr.bf16.gmra.mrb[0].mxu0 %v1622
    %v2210 = vpop.f32.mrb[0].mxu0
    %v2211 = vadd.f32 0.0, %v2210
    %v2212 = vpop.f32.mrb[0].mxu0
    %v2213 = vpop.f32.mrb[0].mxu0
    %v2214 = vpop.f32.mrb[0].mxu0
    %2215 = vdwg.mxu0
    %v2216 = vadd.f32 %v1995, %v2187
    %v2217 = vadd.f32 %v1998, %v2190
    %v2218 = vadd.f32 %v2003, %v2195
    %v2219 = vadd.f32 %v2006, %v2198
    %v2220 = vadd.f32 %v2011, %v2203
    %v2221 = vadd.f32 %v2014, %v2206
    %v2222 = vadd.f32 %v2019, %v2211
    %v2223 = vld [vmem:[%s10] sm:$0x1]
    %v2225 = vlaneseq
    %v2226 = vshrl.u32 %v2225, 7
    %v2227 = vsub.s32 0, %v2226
    %v2228 = vrot.slane %v2223, %v2227
    %v2230 = vadd.f32 %v2216, %v2228
    %v2231 = vadd.f32 %v2217, %v2228
    %v2232 = vadd.f32 %v2218, %v2228
    %v2233 = vadd.f32 %v2219, %v2228
    %v2234 = vadd.f32 %v2220, %v2228
    %v2235 = vadd.f32 %v2221, %v2228
    %v2236 = vadd.f32 %v2222, %v2228
    %v2237 = vand.u32 2147483647, %v2230
    %v2238 = vand.u32 2147483647, %v2231
    %v2239 = vand.u32 2147483647, %v2232
    %v2240 = vand.u32 2147483647, %v2233
    %v2241 = vand.u32 2147483647, %v2234
    %v2242 = vand.u32 2147483647, %v2235
    %v2243 = vand.u32 2147483647, %v2236
    %v2244 = vsub.f32 0.0, %v2237
    %v2245 = vsub.f32 0.0, %v2238
    %v2246 = vsub.f32 0.0, %v2239
    %v2247 = vsub.f32 0.0, %v2240
    %v2248 = vsub.f32 0.0, %v2241
    %v2249 = vsub.f32 0.0, %v2242
    %v2250 = vsub.f32 0.0, %v2243
    %v2251 = vmul.f32 %v2244, 1.442695
    %v2252 = vpow.pop %v2251
    %v2253 = vmul.f32 %v2245, 1.442695
    %v2254 = vpow.pop %v2253
    %v2255 = vmul.f32 %v2246, 1.442695
    %v2256 = vpow.pop %v2255
    %v2257 = vmul.f32 %v2247, 1.442695
    %v2258 = vpow.pop %v2257
    %v2259 = vmul.f32 %v2248, 1.442695
    %v2260 = vpow.pop %v2259
    %v2261 = vmul.f32 %v2249, 1.442695
    %v2262 = vpow.pop %v2261
    %v2263 = vmul.f32 %v2250, 1.442695
    %v2264 = vpow.pop %v2263
    %v2265 = vadd.f32 %v2252, 1.0
    %v2266 = vadd.f32 %v2254, 1.0
    %v2267 = vadd.f32 %v2256, 1.0
    %v2268 = vadd.f32 %v2258, 1.0
    %v2269 = vadd.f32 %v2260, 1.0
    %v2270 = vadd.f32 %v2262, 1.0
    %v2271 = vadd.f32 %v2264, 1.0
    %v2272 = vrcp.pop %v2265
    %v2273 = vrcp.pop %v2266
    %v2274 = vrcp.pop %v2267
    %v2275 = vrcp.pop %v2268
    %v2276 = vrcp.pop %v2269
    %v2277 = vrcp.pop %v2270
    %v2278 = vrcp.pop %v2271
    %vm2279 = vcmp.ge.f32.partialorder %v2230, 0.0
    %vm2280 = vcmp.ge.f32.partialorder %v2231, 0.0
    %vm2281 = vcmp.ge.f32.partialorder %v2232, 0.0
    %vm2282 = vcmp.ge.f32.partialorder %v2233, 0.0
    %vm2283 = vcmp.ge.f32.partialorder %v2234, 0.0
    %vm2284 = vcmp.ge.f32.partialorder %v2235, 0.0
    %vm2285 = vcmp.ge.f32.partialorder %v2236, 0.0
    %v2286 = vmul.f32 %v2252, %v2272
    %v2287 = vmul.f32 %v2254, %v2273
    %v2288 = vmul.f32 %v2256, %v2274
    %v2289 = vmul.f32 %v2258, %v2275
    %v2290 = vmul.f32 %v2260, %v2276
    %v2291 = vmul.f32 %v2262, %v2277
    %v2292 = vmul.f32 %v2264, %v2278
    %v2293 = vsel %vm2279, %v2272, %v2286
    %v2294 = vsel %vm2280, %v2273, %v2287
    %v2295 = vsel %vm2281, %v2274, %v2288
    %v2296 = vsel %vm2282, %v2275, %v2289
    %v2297 = vsel %vm2283, %v2276, %v2290
    %v2298 = vsel %vm2284, %v2277, %v2291
    %v2299 = vsel %vm2285, %v2278, %v2292
    %2300 = vst [vmem:[%s11] sm:$0xff] %v2293
    %2301 = vst [vmem:[%s11 + $0x8] sm:$0xff] %v2294
    %2302 = vst [vmem:[%s11 + $0x10] sm:$0xff] %v2295
    %2303 = vst [vmem:[%s11 + $0x18] sm:$0xff] %v2296
    %2304 = vst [vmem:[%s11 + $0x20] sm:$0xff] %v2297
    %2305 = vst [vmem:[%s11 + $0x28] sm:$0xff] %v2298
    %2306 = vst [vmem:[%s11 + $0x30] sm:$0xff] %v2299
    // Predicated region
    $region74: #{decoder_pallas.1} parent=1 // pred_check
      _
    $region75: #{decoder_pallas.1} parent=1 // pred_check_branch
      %2308 = sbr.rel (0) target = $region77
    $region76: #{decoder_pallas.1} parent=1 // pred_region
      _
    $region77: #{decoder_pallas.1} parent=1 // pred_fallthru
      _
    // Predicated region
    $region78: #{decoder_pallas.1} parent=1 // pred_check
      _
    $region79: #{decoder_pallas.1} parent=1 // pred_check_branch
      %2310 = sbr.rel (0) target = $region81
    $region80: #{decoder_pallas.1} parent=1 // pred_region
      _
    $region81: #{decoder_pallas.1} parent=1 // pred_fallthru
      _
    %2311 = vsyncpa [#allocation5], 1
    %2312 = vsyncpa [#allocation7], 1
    %2313 = vsyncpa [#allocation10], 1
    %2314 = vsyncpa [#allocation13], 1

</llo_original>
